<compile_context>
chip_gen: v6e
topology: v6e:2x2x1
jax: 0.10.0
libtpu: 0.0.40
codegen_flags: <defaults>
</compile_context>

<pallas_src>
import jax
import jax.numpy as jnp
import numpy as np
from jax.experimental import pallas as pl
from jax.experimental.pallas import tpu as pltpu


def _round_up(x, m):
    return ((x + m - 1) // m) * m


def _pick_block_b(B, row_bytes, requested=None):
    """Batch tile: sublane-aligned, ~4 MiB of x per step, >=2 grid steps when B allows."""
    if requested is not None:
        bb = int(requested)
    else:
        bb = max(8, ((4 << 20) // max(row_bytes, 1)) // 8 * 8)     # ~4 MiB of x per step
        if B > 8:
            bb = min(bb, _round_up((B + 1) // 2, 8))               # >=2 steps (v7x: 2 TCs)
    if bb >= B:
        return B                        # single block spanning the whole (maybe <8) batch
    return max(8, (bb // 8) * 8)        # sublane multiple; ragged tail handled by Pallas


def _attention_kernel(x_ref, wproj_ref, bias_ref, expand_ref, sumsel_ref, o_ref):
    x = x_ref[...].astype(jnp.float32)                       # (TB, S*E), lane-dense

    # eij[b, s] = sum_e x[b, s, e] * w[e]  ==  x_flat @ block_diag(w)   (MXU)
    eij = jnp.dot(x, wproj_ref[...],
                  preferred_element_type=jnp.float32,
                  precision=jax.lax.Precision.HIGHEST)        # (TB, S)
    eij = jnp.tanh(eij + bias_ref[...])                       # bias (1, S) broadcast

    a = jnp.exp(eij)                                          # (TB, S)
    denom = jnp.sum(a, axis=1, keepdims=True) + 1e-10
    a = a / denom                                             # exact divide (torch parity)

    # Broadcast softmax weights back to S*E lanes via 0/1 selector (MXU), weight x (VPU).
    a_full = jnp.dot(a, expand_ref[...],
                     preferred_element_type=jnp.float32,
                     precision=jax.lax.Precision.HIGHEST)     # (TB, S*E)
    weighted = x * a_full

    # Step-sum as a (S*E, E) 0/1 selector matmul (MXU).
    out = jnp.dot(weighted, sumsel_ref[...],
                  preferred_element_type=jnp.float32,
                  precision=jax.lax.Precision.HIGHEST)        # (TB, E)
    o_ref[...] = out.astype(o_ref.dtype)


def attention_forward(x, weight, bias, *, block_b=None):
    """x: (B, S, E) any float dtype; weight: (E, 1); bias: (S,). Returns (B, E) in x.dtype."""
    B, S, E = x.shape
    x_flat = x.reshape(B, S * E)                              # free: rows contiguous in HBM
    w = weight.reshape(E).astype(jnp.float32)
    b = bias.reshape(1, S).astype(jnp.float32)

    # VMEM-resident constants (<40 KiB total at S=8, E=32).
    eye_s = jnp.eye(S, dtype=jnp.float32)
    wproj = jnp.kron(eye_s, w.reshape(E, 1))                  # (S*E, S)  block-diag weight
    expand = jnp.repeat(eye_s, E, axis=1)                     # (S, S*E)  expand[s, s*E+e]=1
    sumsel = jnp.tile(jnp.eye(E, dtype=jnp.float32), (S, 1))  # (S*E, E)  step-sum selector

    row_bytes = S * E * x_flat.dtype.itemsize
    bb = _pick_block_b(B, row_bytes, block_b)
    grid = (pl.cdiv(B, bb),)

    out_dtype = x.dtype
    vmem_bytes = (2 * bb * row_bytes                               # double-buffered x tiles
                  + 2 * bb * E * jnp.dtype(out_dtype).itemsize     # output tiles
                  + 2 * 4 * (wproj.size + expand.size + sumsel.size + b.size)
                  + (2 << 20))                                     # slack
    vmem_limit = int(min(60 << 20, max(vmem_bytes, 8 << 20)))

    return pl.pallas_call(
        _attention_kernel,
        out_shape=jax.ShapeDtypeStruct((B, E), out_dtype),
        grid=grid,
        in_specs=[
            pl.BlockSpec((bb, S * E), lambda i: (i, 0)),           # x, tiled over batch
            pl.BlockSpec((S * E, S), lambda i: (0, 0)),            # block-diagonal weight
            pl.BlockSpec((1, S), lambda i: (0, 0)),                # bias
            pl.BlockSpec((S, S * E), lambda i: (0, 0)),            # expand selector
            pl.BlockSpec((S * E, E), lambda i: (0, 0)),            # step-sum selector
        ],
        out_specs=pl.BlockSpec((bb, E), lambda i: (i, 0)),
        compiler_params=pltpu.CompilerParams(
            dimension_semantics=("parallel",),                     # shards batch across TCs
            vmem_limit_bytes=vmem_limit),
    )(x_flat, wproj, b, expand, sumsel)
    # TODO(synk): optional `mask` argument of Attention.forward is not implemented
    # (mask=None path only); a masked variant multiplies a (B, S) mask into `a`
    # before the denominator sum.


def init_params(key, feature_dim, step_dim):
    """Synthetic parameters mirroring the torch __init__ shapes/inits."""
    # Attention.weight: (E, 1), kaiming_uniform_ (fan_in = 1 -> bound = sqrt(6)).
    bound = np.sqrt(6.0)
    att_w = jax.random.uniform(key, (feature_dim, 1), jnp.float32, -bound, bound)
    att_b = jnp.zeros((step_dim,), jnp.float32)
    return att_w, att_b


def reference_forward(x, weight, bias):
    """Pure-JAX reference reproducing the torch forward exactly (mask=None)."""
    B, S, E = x.shape
    eij = jnp.dot(x.reshape(-1, E), weight,
                  precision=jax.lax.Precision.HIGHEST).reshape(-1, S) + bias
    eij = jnp.tanh(eij)
    a = jnp.exp(eij)
    a = a / (jnp.sum(a, axis=1, keepdims=True) + 1e-10)
    return jnp.sum(x * a[:, :, None], axis=1)


if __name__ == "__main__":
    S, E = 8, 32   # step_dim, feature_dim

    key = jax.random.PRNGKey(0)
    kx1, kx2, kp = jax.random.split(key, 3)
    att_w, att_b = init_params(kp, E, S)

    # Small batch: single (partial) block, block dim == full batch dim.
    x_small = jax.random.normal(kx1, (2, S, E), jnp.float32)
    out_small = jax.block_until_ready(attention_forward(x_small, att_w, att_b))
    ref_small = jax.block_until_ready(reference_forward(x_small, att_w, att_b))
    np.testing.assert_allclose(np.asarray(out_small), np.asarray(ref_small),
                               rtol=1e-3, atol=1e-3)

    # Ragged multi-step grid: 50 rows, block_b=16 -> 4 "parallel" steps, last block
    # only 2 valid rows (exercises the no-pad masked-tail path).
    x_big = jax.random.normal(kx2, (50, S, E), jnp.float32)
    out_big = jax.block_until_ready(attention_forward(x_big, att_w, att_b, block_b=16))
    ref_big = jax.block_until_ready(reference_forward(x_big, att_w, att_b))
    np.testing.assert_allclose(np.asarray(out_big), np.asarray(ref_big),
                               rtol=1e-3, atol=1e-3)

    print("KERNEL_OK")
</pallas_src>

<mosaic_0001>
module attributes {stable_mosaic.version = 11 : i64} {
  func.func @_attention_kernel(%arg0: i32, %arg1: memref<2x256xf32, #tpu.memory_space<vmem>>, %arg2: memref<256x8xf32, #tpu.memory_space<vmem>>, %arg3: memref<1x8xf32, #tpu.memory_space<vmem>>, %arg4: memref<8x256xf32, #tpu.memory_space<vmem>>, %arg5: memref<256x32xf32, #tpu.memory_space<vmem>>, %arg6: memref<2x32xf32, #tpu.memory_space<vmem>>) attributes {dimension_semantics = [#tpu.dimension_semantics<parallel>], iteration_bounds = array<i64: 1>, scalar_prefetch = 0 : i64, scratch_operands = 0 : i64, tpu.core_type = #tpu.core_type<tc>, window_params = [{transform_indices = @transform_0, window_bounds = array<i64: 2, 256>}, {pipeline_mode = #tpu.pipeline_mode<synchronous>, transform_indices = @transform_1, window_bounds = array<i64: 256, 8>}, {pipeline_mode = #tpu.pipeline_mode<synchronous>, transform_indices = @transform_2, window_bounds = array<i64: 1, 8>}, {pipeline_mode = #tpu.pipeline_mode<synchronous>, transform_indices = @transform_3, window_bounds = array<i64: 8, 256>}, {pipeline_mode = #tpu.pipeline_mode<synchronous>, transform_indices = @transform_4, window_bounds = array<i64: 256, 32>}, {transform_indices = @transform_5, window_bounds = array<i64: 2, 32>}]} {
    %c0 = arith.constant 0 : index
    %c0_0 = arith.constant 0 : index
    %0 = vector.load %arg1[%c0, %c0_0] : memref<2x256xf32, #tpu.memory_space<vmem>>, vector<2x256xf32>
    %c0_1 = arith.constant 0 : index
    %c0_2 = arith.constant 0 : index
    %1 = vector.load %arg2[%c0_1, %c0_2] : memref<256x8xf32, #tpu.memory_space<vmem>>, vector<256x8xf32>
    %cst = arith.constant dense<0.000000e+00> : vector<2x8xf32>
    %2 = tpu.matmul %0, %1, %cst {dimension_numbers = #tpu.dot_dimension_numbers<[1], [0], [0], [1], [0, 0, 1, 1], [], []>, precision = #tpu.contract_precision<fp32>} : vector<2x256xf32>, vector<256x8xf32>, vector<2x8xf32> -> vector<2x8xf32>
    %c0_3 = arith.constant 0 : index
    %c0_4 = arith.constant 0 : index
    %3 = vector.load %arg3[%c0_3, %c0_4] : memref<1x8xf32, #tpu.memory_space<vmem>>, vector<1x8xf32>
    %4 = vector.broadcast %3 : vector<1x8xf32> to vector<2x8xf32>
    %5 = arith.addf %2, %4 : vector<2x8xf32>
    %6 = math.tanh %5 : vector<2x8xf32>
    %7 = math.exp %6 : vector<2x8xf32>
    %cst_5 = arith.constant dense<0.000000e+00> : vector<2xf32>
    %8 = vector.multi_reduction <add>, %7, %cst_5 [1] : vector<2x8xf32> to vector<2xf32>
    %9 = vector.shape_cast %8 : vector<2xf32> to vector<2x1xf32>
    %cst_6 = arith.constant 1.000000e-10 : f32
    %10 = vector.broadcast %cst_6 : f32 to vector<2x1xf32>
    %11 = arith.addf %9, %10 : vector<2x1xf32>
    %12 = vector.broadcast %11 : vector<2x1xf32> to vector<2x8xf32>
    %13 = arith.divf %7, %12 : vector<2x8xf32>
    %c0_7 = arith.constant 0 : index
    %c0_8 = arith.constant 0 : index
    %14 = vector.load %arg4[%c0_7, %c0_8] : memref<8x256xf32, #tpu.memory_space<vmem>>, vector<8x256xf32>
    %cst_9 = arith.constant dense<0.000000e+00> : vector<2x256xf32>
    %15 = tpu.matmul %13, %14, %cst_9 {dimension_numbers = #tpu.dot_dimension_numbers<[1], [0], [0], [1], [0, 0, 1, 1], [], []>, precision = #tpu.contract_precision<fp32>} : vector<2x8xf32>, vector<8x256xf32>, vector<2x256xf32> -> vector<2x256xf32>
    %16 = arith.mulf %0, %15 : vector<2x256xf32>
    %c0_10 = arith.constant 0 : index
    %c0_11 = arith.constant 0 : index
    %17 = vector.load %arg5[%c0_10, %c0_11] : memref<256x32xf32, #tpu.memory_space<vmem>>, vector<256x32xf32>
    %cst_12 = arith.constant dense<0.000000e+00> : vector<2x32xf32>
    %18 = tpu.matmul %16, %17, %cst_12 {dimension_numbers = #tpu.dot_dimension_numbers<[1], [0], [0], [1], [0, 0, 1, 1], [], []>, precision = #tpu.contract_precision<fp32>} : vector<2x256xf32>, vector<256x32xf32>, vector<2x32xf32> -> vector<2x32xf32>
    %c0_13 = arith.constant 0 : index
    %c0_14 = arith.constant 0 : index
    %19 = vector.load %arg6[%c0_13, %c0_14] : memref<2x32xf32, #tpu.memory_space<vmem>>, vector<2x32xf32>
    tpu.vector_store %arg6[%c0_13, %c0_14], %18 {strides = array<i32>} : memref<2x32xf32, #tpu.memory_space<vmem>>, vector<2x32xf32>,
    return
  }
  func.func @transform_0(%arg0: i32) -> (i32, i32) {
    %c0_i32 = arith.constant 0 : i32
    %c0_i32_0 = arith.constant 0 : i32
    return %arg0, %c0_i32 : i32, i32
  }
  func.func @transform_1(%arg0: i32) -> (i32, i32) {
    %c0_i32 = arith.constant 0 : i32
    %c0_i32_0 = arith.constant 0 : i32
    %c0_i32_1 = arith.constant 0 : i32
    return %c0_i32, %c0_i32_0 : i32, i32
  }
  func.func @transform_2(%arg0: i32) -> (i32, i32) {
    %c0_i32 = arith.constant 0 : i32
    %c0_i32_0 = arith.constant 0 : i32
    %c0_i32_1 = arith.constant 0 : i32
    return %c0_i32, %c0_i32_0 : i32, i32
  }
  func.func @transform_3(%arg0: i32) -> (i32, i32) {
    %c0_i32 = arith.constant 0 : i32
    %c0_i32_0 = arith.constant 0 : i32
    %c0_i32_1 = arith.constant 0 : i32
    return %c0_i32, %c0_i32_0 : i32, i32
  }
  func.func @transform_4(%arg0: i32) -> (i32, i32) {
    %c0_i32 = arith.constant 0 : i32
    %c0_i32_0 = arith.constant 0 : i32
    %c0_i32_1 = arith.constant 0 : i32
    return %c0_i32, %c0_i32_0 : i32, i32
  }
  func.func @transform_5(%arg0: i32) -> (i32, i32) {
    %c0_i32 = arith.constant 0 : i32
    %c0_i32_0 = arith.constant 0 : i32
    return %arg0, %c0_i32 : i32, i32
  }
}

</mosaic_0001>

<llo_original>
// kernel: tpu_custom_call.1
$region0: #{tpu_custom_call.1}
  #allocation0 [shape = 'u32[]', space=smem, size = 0x4, offset = 0x4, fixed_abs, tag = 'smem constant byte address 0x4 - core index']
  #allocation1 [shape = 'u32[144,128]{1,0:T(1,128)}', space=vmem, size = 0x12000, scoped, tag = 'internal scratch']
  %s0 = inlined_call_operand.vmem [shape: f32[2,256], index: 0, kind: input, shape index: {}]
  %s1 = inlined_call_operand.vmem [shape: f32[256,8], index: 1, kind: input, shape index: {}]
  %s2 = inlined_call_operand.vmem [shape: f32[1,8], index: 2, kind: input, shape index: {}]
  %s3 = inlined_call_operand.vmem [shape: f32[8,256], index: 3, kind: input, shape index: {}]
  %s4 = inlined_call_operand.vmem [shape: f32[256,32], index: 4, kind: input, shape index: {}]
  %s5 = inlined_call_operand.hbm [shape: f32[2,32], index: 5, kind: output, shape index: {}]
  %s6 = sld [smem:[#allocation0]]
  $region30: #{tpu_custom_call.1} parent=0
    _
  %s8 = ssub.s32 1, %s6
  %s9 = scalar_select 0, %s8, %s6
  $region1: #{tpu_custom_call.1} parent=0
    #allocation2 [shape = 'u8[1024]{0}', space=vmem, size = 0x400, scoped, tag = 'output window, operand 0, single buffered']
    #allocation3 [shape = 's32[1]{0}', space=sflag, size = 0x4, scoped, tag = 'scoped memory for tpu_custom_call.1']
    %10 = vsyncpa [#allocation3], 0
    // Predicated region
    $region2: #{tpu_custom_call.1} parent=1 // pred_check
      _
    $region3: #{tpu_custom_call.1} parent=1 // pred_check_branch
      %12 = sbr.rel (0) target = $region5
    $region4: #{tpu_custom_call.1} parent=1 // pred_region
      _
    $region5: #{tpu_custom_call.1} parent=1 // pred_fallthru
      _
    // Predicated region
    $region6: #{tpu_custom_call.1} parent=1 // pred_check
      _
    $region7: #{tpu_custom_call.1} parent=1 // pred_check_branch
      %14 = sbr.rel (0) target = $region9
    $region8: #{tpu_custom_call.1} parent=1 // pred_region
      _
    $region9: #{tpu_custom_call.1} parent=1 // pred_fallthru
      _
    // Predicated region
    $region10: #{tpu_custom_call.1} parent=1 // pred_check
      _
    $region11: #{tpu_custom_call.1} parent=1 // pred_check_branch
      %16 = sbr.rel (0) target = $region13
    $region12: #{tpu_custom_call.1} parent=1 // pred_region
      _
    $region13: #{tpu_custom_call.1} parent=1 // pred_fallthru
      _
    // Predicated region
    $region14: #{tpu_custom_call.1} parent=1 // pred_check
      _
    $region15: #{tpu_custom_call.1} parent=1 // pred_check_branch
      %18 = sbr.rel (0) target = $region17
    $region16: #{tpu_custom_call.1} parent=1 // pred_region
      _
    $region17: #{tpu_custom_call.1} parent=1 // pred_fallthru
      _
    // Predicated region
    $region18: #{tpu_custom_call.1} parent=1 // pred_check
      _
    $region19: #{tpu_custom_call.1} parent=1 // pred_check_branch
      %20 = sbr.rel (0) target = $region21
    $region20: #{tpu_custom_call.1} parent=1 // pred_region
      _
    $region21: #{tpu_custom_call.1} parent=1 // pred_fallthru
      _
    %v21 = vld [vmem:[%s0] sm:$0xf]
    %v22 = vld [vmem:[%s1] sm:$0xff]
    %v23 = vld [vmem:[%s1 + $0x8] sm:$0xff]
    %v24 = vld [vmem:[%s1 + $0x10] sm:$0xff]
    %v25 = vld [vmem:[%s1 + $0x18] sm:$0xff]
    %v26 = vld [vmem:[%s1 + $0x20] sm:$0xff]
    %v27 = vld [vmem:[%s1 + $0x28] sm:$0xff]
    %v28 = vld [vmem:[%s1 + $0x30] sm:$0xff]
    %v29 = vld [vmem:[%s1 + $0x38] sm:$0xff]
    %v30 = vld [vmem:[%s1 + $0x40] sm:$0xff]
    %v31 = vld [vmem:[%s1 + $0x48] sm:$0xff]
    %v32 = vld [vmem:[%s1 + $0x50] sm:$0xff]
    %v33 = vld [vmem:[%s1 + $0x58] sm:$0xff]
    %v34 = vld [vmem:[%s1 + $0x60] sm:$0xff]
    %v35 = vld [vmem:[%s1 + $0x68] sm:$0xff]
    %v36 = vld [vmem:[%s1 + $0x70] sm:$0xff]
    %v37 = vld [vmem:[%s1 + $0x78] sm:$0xff]
    %v38 = vld [vmem:[%s1 + $0x80] sm:$0xff]
    %v39 = vld [vmem:[%s1 + $0x88] sm:$0xff]
    %v40 = vld [vmem:[%s1 + $0x90] sm:$0xff]
    %v41 = vld [vmem:[%s1 + $0x98] sm:$0xff]
    %v42 = vld [vmem:[%s1 + $0xa0] sm:$0xff]
    %v43 = vld [vmem:[%s1 + $0xa8] sm:$0xff]
    %v44 = vld [vmem:[%s1 + $0xb0] sm:$0xff]
    %v45 = vld [vmem:[%s1 + $0xb8] sm:$0xff]
    %v46 = vld [vmem:[%s1 + $0xc0] sm:$0xff]
    %v47 = vld [vmem:[%s1 + $0xc8] sm:$0xff]
    %v48 = vld [vmem:[%s1 + $0xd0] sm:$0xff]
    %v49 = vld [vmem:[%s1 + $0xd8] sm:$0xff]
    %v50 = vld [vmem:[%s1 + $0xe0] sm:$0xff]
    %v51 = vld [vmem:[%s1 + $0xe8] sm:$0xff]
    %v52 = vld [vmem:[%s1 + $0xf0] sm:$0xff]
    %v53 = vld [vmem:[%s1 + $0xf8] sm:$0xff]
    %v54 = vld [vmem:[%s2] sm:$0x1]
    %v56 = vlaneseq
    %v57 = vshrl.u32 %v56, 7
    %v58 = vsub.s32 0, %v57
    %v59 = vrot.slane %v54, %v58
    %v63 = vunpack.c.l.s4 1983009808
    %v64 = vunpack.c.0.s8 %v63
    %v65 = vlaneseq
    %v66 = vshrl.u32 %v65, 7
    %v67 = vsub.s32 %v64, %v66
    %v68 = vrot.slane %v21, %v67
    %v69 = vcombine.high %v68, %v68
    %72 = vmatprep.subr.mxu0 0.0
    %v73 = vand.u32 %v37, 4294901760
    %74 = vmatpush1.msra.mxu0 %v73
    %75 = vmatprep.subr.mxu0 0.0
    %v76 = vand.u32 %v36, 4294901760
    %77 = vmatpush1.msra.mxu0 %v76
    %78 = vmatprep.subr.mxu0 0.0
    %v79 = vand.u32 %v35, 4294901760
    %80 = vmatpush1.msra.mxu0 %v79
    %81 = vmatprep.subr.mxu0 0.0
    %v82 = vand.u32 %v34, 4294901760
    %83 = vmatpush1.msra.mxu0 %v82
    %84 = vmatprep.subr.mxu0 0.0
    %v85 = vand.u32 %v33, 4294901760
    %86 = vmatpush1.msra.mxu0 %v85
    %87 = vmatprep.subr.mxu0 0.0
    %v88 = vand.u32 %v32, 4294901760
    %89 = vmatpush1.msra.mxu0 %v88
    %90 = vmatprep.subr.mxu0 0.0
    %v91 = vand.u32 %v31, 4294901760
    %92 = vmatpush1.msra.mxu0 %v91
    %93 = vmatprep.subr.mxu0 0.0
    %v94 = vand.u32 %v30, 4294901760
    %95 = vmatpush1.msra.mxu0 %v94
    %96 = vmatprep.subr.mxu0 0.0
    %v97 = vand.u32 %v29, 4294901760
    %98 = vmatpush1.msra.mxu0 %v97
    %99 = vmatprep.subr.mxu0 0.0
    %v100 = vand.u32 %v28, 4294901760
    %101 = vmatpush1.msra.mxu0 %v100
    %102 = vmatprep.subr.mxu0 0.0
    %v103 = vand.u32 %v27, 4294901760
    %104 = vmatpush1.msra.mxu0 %v103
    %105 = vmatprep.subr.mxu0 0.0
    %v106 = vand.u32 %v26, 4294901760
    %107 = vmatpush1.msra.mxu0 %v106
    %108 = vmatprep.subr.mxu0 0.0
    %v109 = vand.u32 %v25, 4294901760
    %110 = vmatpush1.msra.mxu0 %v109
    %111 = vmatprep.subr.mxu0 0.0
    %v112 = vand.u32 %v24, 4294901760
    %113 = vmatpush1.msra.mxu0 %v112
    %114 = vmatprep.subr.mxu0 0.0
    %v115 = vand.u32 %v23, 4294901760
    %116 = vmatpush1.msra.mxu0 %v115
    %117 = vmatprep.subr.mxu0 0.0
    %v118 = vand.u32 %v22, 4294901760
    %119 = vmatpush1.msra.mxu0 %v118
    %120 = vmatprep.subr.mxu0 0.0
    %v121 = vand.u32 %v53, 4294901760
    %122 = vmatpush2.msra.mxu0 %v121
    %123 = vmatprep.subr.mxu0 0.0
    %v124 = vand.u32 %v52, 4294901760
    %125 = vmatpush2.msra.mxu0 %v124
    %126 = vmatprep.subr.mxu0 0.0
    %v127 = vand.u32 %v51, 4294901760
    %128 = vmatpush2.msra.mxu0 %v127
    %129 = vmatprep.subr.mxu0 0.0
    %v130 = vand.u32 %v50, 4294901760
    %131 = vmatpush2.msra.mxu0 %v130
    %132 = vmatprep.subr.mxu0 0.0
    %v133 = vand.u32 %v49, 4294901760
    %134 = vmatpush2.msra.mxu0 %v133
    %135 = vmatprep.subr.mxu0 0.0
    %v136 = vand.u32 %v48, 4294901760
    %137 = vmatpush2.msra.mxu0 %v136
    %138 = vmatprep.subr.mxu0 0.0
    %v139 = vand.u32 %v47, 4294901760
    %140 = vmatpush2.msra.mxu0 %v139
    %141 = vmatprep.subr.mxu0 0.0
    %v142 = vand.u32 %v46, 4294901760
    %143 = vmatpush2.msra.mxu0 %v142
    %144 = vmatprep.subr.mxu0 0.0
    %v145 = vand.u32 %v45, 4294901760
    %146 = vmatpush2.msra.mxu0 %v145
    %147 = vmatprep.subr.mxu0 0.0
    %v148 = vand.u32 %v44, 4294901760
    %149 = vmatpush2.msra.mxu0 %v148
    %150 = vmatprep.subr.mxu0 0.0
    %v151 = vand.u32 %v43, 4294901760
    %152 = vmatpush2.msra.mxu0 %v151
    %153 = vmatprep.subr.mxu0 0.0
    %v154 = vand.u32 %v42, 4294901760
    %155 = vmatpush2.msra.mxu0 %v154
    %156 = vmatprep.subr.mxu0 0.0
    %v157 = vand.u32 %v41, 4294901760
    %158 = vmatpush2.msra.mxu0 %v157
    %159 = vmatprep.subr.mxu0 0.0
    %v160 = vand.u32 %v40, 4294901760
    %161 = vmatpush2.msra.mxu0 %v160
    %162 = vmatprep.subr.mxu0 0.0
    %v163 = vand.u32 %v39, 4294901760
    %164 = vmatpush2.msra.mxu0 %v163
    %165 = vmatprep.subr.mxu0 0.0
    %v166 = vand.u32 %v38, 4294901760
    %167 = vmatpush2.msra.mxu0 %v166
    %v168 = vand.u32 %v69, 4294901760
    %v169 = vsub.f32 %v69, %v168
    %v170 = vand.u32 %v169, 4294901760
    %v171 = vsub.f32 %v169, %v170
    %v172 = vand.u32 %v171, 4294901760
    %173 = vmatprep.mubr.f32.mxu0 %v172
    %v174 = vand.u32 %v68, 4294901760
    %v175 = vsub.f32 %v68, %v174
    %v176 = vand.u32 %v175, 4294901760
    %v177 = vsub.f32 %v175, %v176
    %v178 = vand.u32 %v177, 4294901760
    %179 = vmatmul.mubr.f32.gmra.mxu0 %v178
    %v180 = vpop.f32.mrf.mxu0
    %v181 = vadd.f32 %v59, %v180
    %v182 = vpop.f32.mrf.mxu0
    %183 = vdwg.mxu0
    %184 = vmatprep.subr.mxu0 0.0
    %v185 = vand.u32 %v37, 4294901760
    %v186 = vsub.f32 %v37, %v185
    %v187 = vand.u32 %v186, 4294901760
    %v188 = vsub.f32 %v186, %v187
    %v189 = vand.u32 %v188, 4294901760
    %190 = vmatpush1.msra.mxu0 %v189
    %191 = vmatprep.subr.mxu0 0.0
    %v192 = vand.u32 %v36, 4294901760
    %v193 = vsub.f32 %v36, %v192
    %v194 = vand.u32 %v193, 4294901760
    %v195 = vsub.f32 %v193, %v194
    %v196 = vand.u32 %v195, 4294901760
    %197 = vmatpush1.msra.mxu0 %v196
    %198 = vmatprep.subr.mxu0 0.0
    %v199 = vand.u32 %v35, 4294901760
    %v200 = vsub.f32 %v35, %v199
    %v201 = vand.u32 %v200, 4294901760
    %v202 = vsub.f32 %v200, %v201
    %v203 = vand.u32 %v202, 4294901760
    %204 = vmatpush1.msra.mxu0 %v203
    %205 = vmatprep.subr.mxu0 0.0
    %v206 = vand.u32 %v34, 4294901760
    %v207 = vsub.f32 %v34, %v206
    %v208 = vand.u32 %v207, 4294901760
    %v209 = vsub.f32 %v207, %v208
    %v210 = vand.u32 %v209, 4294901760
    %211 = vmatpush1.msra.mxu0 %v210
    %212 = vmatprep.subr.mxu0 0.0
    %v213 = vand.u32 %v33, 4294901760
    %v214 = vsub.f32 %v33, %v213
    %v215 = vand.u32 %v214, 4294901760
    %v216 = vsub.f32 %v214, %v215
    %v217 = vand.u32 %v216, 4294901760
    %218 = vmatpush1.msra.mxu0 %v217
    %219 = vmatprep.subr.mxu0 0.0
    %v220 = vand.u32 %v32, 4294901760
    %v221 = vsub.f32 %v32, %v220
    %v222 = vand.u32 %v221, 4294901760
    %v223 = vsub.f32 %v221, %v222
    %v224 = vand.u32 %v223, 4294901760
    %225 = vmatpush1.msra.mxu0 %v224
    %226 = vmatprep.subr.mxu0 0.0
    %v227 = vand.u32 %v31, 4294901760
    %v228 = vsub.f32 %v31, %v227
    %v229 = vand.u32 %v228, 4294901760
    %v230 = vsub.f32 %v228, %v229
    %v231 = vand.u32 %v230, 4294901760
    %232 = vmatpush1.msra.mxu0 %v231
    %233 = vmatprep.subr.mxu0 0.0
    %v234 = vand.u32 %v30, 4294901760
    %v235 = vsub.f32 %v30, %v234
    %v236 = vand.u32 %v235, 4294901760
    %v237 = vsub.f32 %v235, %v236
    %v238 = vand.u32 %v237, 4294901760
    %239 = vmatpush1.msra.mxu0 %v238
    %240 = vmatprep.subr.mxu0 0.0
    %v241 = vand.u32 %v29, 4294901760
    %v242 = vsub.f32 %v29, %v241
    %v243 = vand.u32 %v242, 4294901760
    %v244 = vsub.f32 %v242, %v243
    %v245 = vand.u32 %v244, 4294901760
    %246 = vmatpush1.msra.mxu0 %v245
    %247 = vmatprep.subr.mxu0 0.0
    %v248 = vand.u32 %v28, 4294901760
    %v249 = vsub.f32 %v28, %v248
    %v250 = vand.u32 %v249, 4294901760
    %v251 = vsub.f32 %v249, %v250
    %v252 = vand.u32 %v251, 4294901760
    %253 = vmatpush1.msra.mxu0 %v252
    %254 = vmatprep.subr.mxu0 0.0
    %v255 = vand.u32 %v27, 4294901760
    %v256 = vsub.f32 %v27, %v255
    %v257 = vand.u32 %v256, 4294901760
    %v258 = vsub.f32 %v256, %v257
    %v259 = vand.u32 %v258, 4294901760
    %260 = vmatpush1.msra.mxu0 %v259
    %261 = vmatprep.subr.mxu0 0.0
    %v262 = vand.u32 %v26, 4294901760
    %v263 = vsub.f32 %v26, %v262
    %v264 = vand.u32 %v263, 4294901760
    %v265 = vsub.f32 %v263, %v264
    %v266 = vand.u32 %v265, 4294901760
    %267 = vmatpush1.msra.mxu0 %v266
    %268 = vmatprep.subr.mxu0 0.0
    %v269 = vand.u32 %v25, 4294901760
    %v270 = vsub.f32 %v25, %v269
    %v271 = vand.u32 %v270, 4294901760
    %v272 = vsub.f32 %v270, %v271
    %v273 = vand.u32 %v272, 4294901760
    %274 = vmatpush1.msra.mxu0 %v273
    %275 = vmatprep.subr.mxu0 0.0
    %v276 = vand.u32 %v24, 4294901760
    %v277 = vsub.f32 %v24, %v276
    %v278 = vand.u32 %v277, 4294901760
    %v279 = vsub.f32 %v277, %v278
    %v280 = vand.u32 %v279, 4294901760
    %281 = vmatpush1.msra.mxu0 %v280
    %282 = vmatprep.subr.mxu0 0.0
    %v283 = vand.u32 %v23, 4294901760
    %v284 = vsub.f32 %v23, %v283
    %v285 = vand.u32 %v284, 4294901760
    %v286 = vsub.f32 %v284, %v285
    %v287 = vand.u32 %v286, 4294901760
    %288 = vmatpush1.msra.mxu0 %v287
    %289 = vmatprep.subr.mxu0 0.0
    %v290 = vand.u32 %v22, 4294901760
    %v291 = vsub.f32 %v22, %v290
    %v292 = vand.u32 %v291, 4294901760
    %v293 = vsub.f32 %v291, %v292
    %v294 = vand.u32 %v293, 4294901760
    %295 = vmatpush1.msra.mxu0 %v294
    %296 = vmatprep.subr.mxu0 0.0
    %v297 = vand.u32 %v53, 4294901760
    %v298 = vsub.f32 %v53, %v297
    %v299 = vand.u32 %v298, 4294901760
    %v300 = vsub.f32 %v298, %v299
    %v301 = vand.u32 %v300, 4294901760
    %302 = vmatpush2.msra.mxu0 %v301
    %303 = vmatprep.subr.mxu0 0.0
    %v304 = vand.u32 %v52, 4294901760
    %v305 = vsub.f32 %v52, %v304
    %v306 = vand.u32 %v305, 4294901760
    %v307 = vsub.f32 %v305, %v306
    %v308 = vand.u32 %v307, 4294901760
    %309 = vmatpush2.msra.mxu0 %v308
    %310 = vmatprep.subr.mxu0 0.0
    %v311 = vand.u32 %v51, 4294901760
    %v312 = vsub.f32 %v51, %v311
    %v313 = vand.u32 %v312, 4294901760
    %v314 = vsub.f32 %v312, %v313
    %v315 = vand.u32 %v314, 4294901760
    %316 = vmatpush2.msra.mxu0 %v315
    %317 = vmatprep.subr.mxu0 0.0
    %v318 = vand.u32 %v50, 4294901760
    %v319 = vsub.f32 %v50, %v318
    %v320 = vand.u32 %v319, 4294901760
    %v321 = vsub.f32 %v319, %v320
    %v322 = vand.u32 %v321, 4294901760
    %323 = vmatpush2.msra.mxu0 %v322
    %324 = vmatprep.subr.mxu0 0.0
    %v325 = vand.u32 %v49, 4294901760
    %v326 = vsub.f32 %v49, %v325
    %v327 = vand.u32 %v326, 4294901760
    %v328 = vsub.f32 %v326, %v327
    %v329 = vand.u32 %v328, 4294901760
    %330 = vmatpush2.msra.mxu0 %v329
    %331 = vmatprep.subr.mxu0 0.0
    %v332 = vand.u32 %v48, 4294901760
    %v333 = vsub.f32 %v48, %v332
    %v334 = vand.u32 %v333, 4294901760
    %v335 = vsub.f32 %v333, %v334
    %v336 = vand.u32 %v335, 4294901760
    %337 = vmatpush2.msra.mxu0 %v336
    %338 = vmatprep.subr.mxu0 0.0
    %v339 = vand.u32 %v47, 4294901760
    %v340 = vsub.f32 %v47, %v339
    %v341 = vand.u32 %v340, 4294901760
    %v342 = vsub.f32 %v340, %v341
    %v343 = vand.u32 %v342, 4294901760
    %344 = vmatpush2.msra.mxu0 %v343
    %345 = vmatprep.subr.mxu0 0.0
    %v346 = vand.u32 %v46, 4294901760
    %v347 = vsub.f32 %v46, %v346
    %v348 = vand.u32 %v347, 4294901760
    %v349 = vsub.f32 %v347, %v348
    %v350 = vand.u32 %v349, 4294901760
    %351 = vmatpush2.msra.mxu0 %v350
    %352 = vmatprep.subr.mxu0 0.0
    %v353 = vand.u32 %v45, 4294901760
    %v354 = vsub.f32 %v45, %v353
    %v355 = vand.u32 %v354, 4294901760
    %v356 = vsub.f32 %v354, %v355
    %v357 = vand.u32 %v356, 4294901760
    %358 = vmatpush2.msra.mxu0 %v357
    %359 = vmatprep.subr.mxu0 0.0
    %v360 = vand.u32 %v44, 4294901760
    %v361 = vsub.f32 %v44, %v360
    %v362 = vand.u32 %v361, 4294901760
    %v363 = vsub.f32 %v361, %v362
    %v364 = vand.u32 %v363, 4294901760
    %365 = vmatpush2.msra.mxu0 %v364
    %366 = vmatprep.subr.mxu0 0.0
    %v367 = vand.u32 %v43, 4294901760
    %v368 = vsub.f32 %v43, %v367
    %v369 = vand.u32 %v368, 4294901760
    %v370 = vsub.f32 %v368, %v369
    %v371 = vand.u32 %v370, 4294901760
    %372 = vmatpush2.msra.mxu0 %v371
    %373 = vmatprep.subr.mxu0 0.0
    %v374 = vand.u32 %v42, 4294901760
    %v375 = vsub.f32 %v42, %v374
    %v376 = vand.u32 %v375, 4294901760
    %v377 = vsub.f32 %v375, %v376
    %v378 = vand.u32 %v377, 4294901760
    %379 = vmatpush2.msra.mxu0 %v378
    %380 = vmatprep.subr.mxu0 0.0
    %v381 = vand.u32 %v41, 4294901760
    %v382 = vsub.f32 %v41, %v381
    %v383 = vand.u32 %v382, 4294901760
    %v384 = vsub.f32 %v382, %v383
    %v385 = vand.u32 %v384, 4294901760
    %386 = vmatpush2.msra.mxu0 %v385
    %387 = vmatprep.subr.mxu0 0.0
    %v388 = vand.u32 %v40, 4294901760
    %v389 = vsub.f32 %v40, %v388
    %v390 = vand.u32 %v389, 4294901760
    %v391 = vsub.f32 %v389, %v390
    %v392 = vand.u32 %v391, 4294901760
    %393 = vmatpush2.msra.mxu0 %v392
    %394 = vmatprep.subr.mxu0 0.0
    %v395 = vand.u32 %v39, 4294901760
    %v396 = vsub.f32 %v39, %v395
    %v397 = vand.u32 %v396, 4294901760
    %v398 = vsub.f32 %v396, %v397
    %v399 = vand.u32 %v398, 4294901760
    %400 = vmatpush2.msra.mxu0 %v399
    %401 = vmatprep.subr.mxu0 0.0
    %v402 = vand.u32 %v38, 4294901760
    %v403 = vsub.f32 %v38, %v402
    %v404 = vand.u32 %v403, 4294901760
    %v405 = vsub.f32 %v403, %v404
    %v406 = vand.u32 %v405, 4294901760
    %407 = vmatpush2.msra.mxu0 %v406
    %v408 = vand.u32 %v69, 4294901760
    %409 = vmatprep.mubr.f32.mxu0 %v408
    %v410 = vand.u32 %v68, 4294901760
    %411 = vmatmul.mubr.f32.gmra.mxu0 %v410
    %v412 = vpop.f32.mrf.mxu0
    %v413 = vadd.f32 %v181, %v412
    %v414 = vpop.f32.mrf.mxu0
    %415 = vdwg.mxu0
    %416 = vmatprep.subr.mxu0 0.0
    %v417 = vand.u32 %v37, 4294901760
    %v418 = vsub.f32 %v37, %v417
    %419 = vmatpush1.msra.mxu0 %v418
    %420 = vmatprep.subr.mxu0 0.0
    %v421 = vand.u32 %v36, 4294901760
    %v422 = vsub.f32 %v36, %v421
    %423 = vmatpush1.msra.mxu0 %v422
    %424 = vmatprep.subr.mxu0 0.0
    %v425 = vand.u32 %v35, 4294901760
    %v426 = vsub.f32 %v35, %v425
    %427 = vmatpush1.msra.mxu0 %v426
    %428 = vmatprep.subr.mxu0 0.0
    %v429 = vand.u32 %v34, 4294901760
    %v430 = vsub.f32 %v34, %v429
    %431 = vmatpush1.msra.mxu0 %v430
    %432 = vmatprep.subr.mxu0 0.0
    %v433 = vand.u32 %v33, 4294901760
    %v434 = vsub.f32 %v33, %v433
    %435 = vmatpush1.msra.mxu0 %v434
    %436 = vmatprep.subr.mxu0 0.0
    %v437 = vand.u32 %v32, 4294901760
    %v438 = vsub.f32 %v32, %v437
    %439 = vmatpush1.msra.mxu0 %v438
    %440 = vmatprep.subr.mxu0 0.0
    %v441 = vand.u32 %v31, 4294901760
    %v442 = vsub.f32 %v31, %v441
    %443 = vmatpush1.msra.mxu0 %v442
    %444 = vmatprep.subr.mxu0 0.0
    %v445 = vand.u32 %v30, 4294901760
    %v446 = vsub.f32 %v30, %v445
    %447 = vmatpush1.msra.mxu0 %v446
    %448 = vmatprep.subr.mxu0 0.0
    %v449 = vand.u32 %v29, 4294901760
    %v450 = vsub.f32 %v29, %v449
    %451 = vmatpush1.msra.mxu0 %v450
    %452 = vmatprep.subr.mxu0 0.0
    %v453 = vand.u32 %v28, 4294901760
    %v454 = vsub.f32 %v28, %v453
    %455 = vmatpush1.msra.mxu0 %v454
    %456 = vmatprep.subr.mxu0 0.0
    %v457 = vand.u32 %v27, 4294901760
    %v458 = vsub.f32 %v27, %v457
    %459 = vmatpush1.msra.mxu0 %v458
    %460 = vmatprep.subr.mxu0 0.0
    %v461 = vand.u32 %v26, 4294901760
    %v462 = vsub.f32 %v26, %v461
    %463 = vmatpush1.msra.mxu0 %v462
    %464 = vmatprep.subr.mxu0 0.0
    %v465 = vand.u32 %v25, 4294901760
    %v466 = vsub.f32 %v25, %v465
    %467 = vmatpush1.msra.mxu0 %v466
    %468 = vmatprep.subr.mxu0 0.0
    %v469 = vand.u32 %v24, 4294901760
    %v470 = vsub.f32 %v24, %v469
    %471 = vmatpush1.msra.mxu0 %v470
    %472 = vmatprep.subr.mxu0 0.0
    %v473 = vand.u32 %v23, 4294901760
    %v474 = vsub.f32 %v23, %v473
    %475 = vmatpush1.msra.mxu0 %v474
    %476 = vmatprep.subr.mxu0 0.0
    %v477 = vand.u32 %v22, 4294901760
    %v478 = vsub.f32 %v22, %v477
    %479 = vmatpush1.msra.mxu0 %v478
    %480 = vmatprep.subr.mxu0 0.0
    %v481 = vand.u32 %v53, 4294901760
    %v482 = vsub.f32 %v53, %v481
    %483 = vmatpush2.msra.mxu0 %v482
    %484 = vmatprep.subr.mxu0 0.0
    %v485 = vand.u32 %v52, 4294901760
    %v486 = vsub.f32 %v52, %v485
    %487 = vmatpush2.msra.mxu0 %v486
    %488 = vmatprep.subr.mxu0 0.0
    %v489 = vand.u32 %v51, 4294901760
    %v490 = vsub.f32 %v51, %v489
    %491 = vmatpush2.msra.mxu0 %v490
    %492 = vmatprep.subr.mxu0 0.0
    %v493 = vand.u32 %v50, 4294901760
    %v494 = vsub.f32 %v50, %v493
    %495 = vmatpush2.msra.mxu0 %v494
    %496 = vmatprep.subr.mxu0 0.0
    %v497 = vand.u32 %v49, 4294901760
    %v498 = vsub.f32 %v49, %v497
    %499 = vmatpush2.msra.mxu0 %v498
    %500 = vmatprep.subr.mxu0 0.0
    %v501 = vand.u32 %v48, 4294901760
    %v502 = vsub.f32 %v48, %v501
    %503 = vmatpush2.msra.mxu0 %v502
    %504 = vmatprep.subr.mxu0 0.0
    %v505 = vand.u32 %v47, 4294901760
    %v506 = vsub.f32 %v47, %v505
    %507 = vmatpush2.msra.mxu0 %v506
    %508 = vmatprep.subr.mxu0 0.0
    %v509 = vand.u32 %v46, 4294901760
    %v510 = vsub.f32 %v46, %v509
    %511 = vmatpush2.msra.mxu0 %v510
    %512 = vmatprep.subr.mxu0 0.0
    %v513 = vand.u32 %v45, 4294901760
    %v514 = vsub.f32 %v45, %v513
    %515 = vmatpush2.msra.mxu0 %v514
    %516 = vmatprep.subr.mxu0 0.0
    %v517 = vand.u32 %v44, 4294901760
    %v518 = vsub.f32 %v44, %v517
    %519 = vmatpush2.msra.mxu0 %v518
    %520 = vmatprep.subr.mxu0 0.0
    %v521 = vand.u32 %v43, 4294901760
    %v522 = vsub.f32 %v43, %v521
    %523 = vmatpush2.msra.mxu0 %v522
    %524 = vmatprep.subr.mxu0 0.0
    %v525 = vand.u32 %v42, 4294901760
    %v526 = vsub.f32 %v42, %v525
    %527 = vmatpush2.msra.mxu0 %v526
    %528 = vmatprep.subr.mxu0 0.0
    %v529 = vand.u32 %v41, 4294901760
    %v530 = vsub.f32 %v41, %v529
    %531 = vmatpush2.msra.mxu0 %v530
    %532 = vmatprep.subr.mxu0 0.0
    %v533 = vand.u32 %v40, 4294901760
    %v534 = vsub.f32 %v40, %v533
    %535 = vmatpush2.msra.mxu0 %v534
    %536 = vmatprep.subr.mxu0 0.0
    %v537 = vand.u32 %v39, 4294901760
    %v538 = vsub.f32 %v39, %v537
    %539 = vmatpush2.msra.mxu0 %v538
    %540 = vmatprep.subr.mxu0 0.0
    %v541 = vand.u32 %v38, 4294901760
    %v542 = vsub.f32 %v38, %v541
    %543 = vmatpush2.msra.mxu0 %v542
    %v544 = vand.u32 %v69, 4294901760
    %v545 = vsub.f32 %v69, %v544
    %546 = vmatprep.mubr.f32.mxu0 %v545
    %v547 = vand.u32 %v68, 4294901760
    %v548 = vsub.f32 %v68, %v547
    %549 = vmatmul.mubr.f32.gmra.mxu0 %v548
    %v550 = vpop.f32.mrf.mxu0
    %v551 = vadd.f32 %v413, %v550
    %v552 = vpop.f32.mrf.mxu0
    %553 = vdwg.mxu0
    %554 = vmatprep.subr.mxu0 0.0
    %v555 = vand.u32 %v37, 4294901760
    %556 = vmatpush1.msra.mxu0 %v555
    %557 = vmatprep.subr.mxu0 0.0
    %v558 = vand.u32 %v36, 4294901760
    %559 = vmatpush1.msra.mxu0 %v558
    %560 = vmatprep.subr.mxu0 0.0
    %v561 = vand.u32 %v35, 4294901760
    %562 = vmatpush1.msra.mxu0 %v561
    %563 = vmatprep.subr.mxu0 0.0
    %v564 = vand.u32 %v34, 4294901760
    %565 = vmatpush1.msra.mxu0 %v564
    %566 = vmatprep.subr.mxu0 0.0
    %v567 = vand.u32 %v33, 4294901760
    %568 = vmatpush1.msra.mxu0 %v567
    %569 = vmatprep.subr.mxu0 0.0
    %v570 = vand.u32 %v32, 4294901760
    %571 = vmatpush1.msra.mxu0 %v570
    %572 = vmatprep.subr.mxu0 0.0
    %v573 = vand.u32 %v31, 4294901760
    %574 = vmatpush1.msra.mxu0 %v573
    %575 = vmatprep.subr.mxu0 0.0
    %v576 = vand.u32 %v30, 4294901760
    %577 = vmatpush1.msra.mxu0 %v576
    %578 = vmatprep.subr.mxu0 0.0
    %v579 = vand.u32 %v29, 4294901760
    %580 = vmatpush1.msra.mxu0 %v579
    %581 = vmatprep.subr.mxu0 0.0
    %v582 = vand.u32 %v28, 4294901760
    %583 = vmatpush1.msra.mxu0 %v582
    %584 = vmatprep.subr.mxu0 0.0
    %v585 = vand.u32 %v27, 4294901760
    %586 = vmatpush1.msra.mxu0 %v585
    %587 = vmatprep.subr.mxu0 0.0
    %v588 = vand.u32 %v26, 4294901760
    %589 = vmatpush1.msra.mxu0 %v588
    %590 = vmatprep.subr.mxu0 0.0
    %v591 = vand.u32 %v25, 4294901760
    %592 = vmatpush1.msra.mxu0 %v591
    %593 = vmatprep.subr.mxu0 0.0
    %v594 = vand.u32 %v24, 4294901760
    %595 = vmatpush1.msra.mxu0 %v594
    %596 = vmatprep.subr.mxu0 0.0
    %v597 = vand.u32 %v23, 4294901760
    %598 = vmatpush1.msra.mxu0 %v597
    %599 = vmatprep.subr.mxu0 0.0
    %v600 = vand.u32 %v22, 4294901760
    %601 = vmatpush1.msra.mxu0 %v600
    %602 = vmatprep.subr.mxu0 0.0
    %v603 = vand.u32 %v53, 4294901760
    %604 = vmatpush2.msra.mxu0 %v603
    %605 = vmatprep.subr.mxu0 0.0
    %v606 = vand.u32 %v52, 4294901760
    %607 = vmatpush2.msra.mxu0 %v606
    %608 = vmatprep.subr.mxu0 0.0
    %v609 = vand.u32 %v51, 4294901760
    %610 = vmatpush2.msra.mxu0 %v609
    %611 = vmatprep.subr.mxu0 0.0
    %v612 = vand.u32 %v50, 4294901760
    %613 = vmatpush2.msra.mxu0 %v612
    %614 = vmatprep.subr.mxu0 0.0
    %v615 = vand.u32 %v49, 4294901760
    %616 = vmatpush2.msra.mxu0 %v615
    %617 = vmatprep.subr.mxu0 0.0
    %v618 = vand.u32 %v48, 4294901760
    %619 = vmatpush2.msra.mxu0 %v618
    %620 = vmatprep.subr.mxu0 0.0
    %v621 = vand.u32 %v47, 4294901760
    %622 = vmatpush2.msra.mxu0 %v621
    %623 = vmatprep.subr.mxu0 0.0
    %v624 = vand.u32 %v46, 4294901760
    %625 = vmatpush2.msra.mxu0 %v624
    %626 = vmatprep.subr.mxu0 0.0
    %v627 = vand.u32 %v45, 4294901760
    %628 = vmatpush2.msra.mxu0 %v627
    %629 = vmatprep.subr.mxu0 0.0
    %v630 = vand.u32 %v44, 4294901760
    %631 = vmatpush2.msra.mxu0 %v630
    %632 = vmatprep.subr.mxu0 0.0
    %v633 = vand.u32 %v43, 4294901760
    %634 = vmatpush2.msra.mxu0 %v633
    %635 = vmatprep.subr.mxu0 0.0
    %v636 = vand.u32 %v42, 4294901760
    %637 = vmatpush2.msra.mxu0 %v636
    %638 = vmatprep.subr.mxu0 0.0
    %v639 = vand.u32 %v41, 4294901760
    %640 = vmatpush2.msra.mxu0 %v639
    %641 = vmatprep.subr.mxu0 0.0
    %v642 = vand.u32 %v40, 4294901760
    %643 = vmatpush2.msra.mxu0 %v642
    %644 = vmatprep.subr.mxu0 0.0
    %v645 = vand.u32 %v39, 4294901760
    %646 = vmatpush2.msra.mxu0 %v645
    %647 = vmatprep.subr.mxu0 0.0
    %v648 = vand.u32 %v38, 4294901760
    %649 = vmatpush2.msra.mxu0 %v648
    %v650 = vand.u32 %v69, 4294901760
    %v651 = vsub.f32 %v69, %v650
    %v652 = vand.u32 %v651, 4294901760
    %653 = vmatprep.mubr.f32.mxu0 %v652
    %v654 = vand.u32 %v68, 4294901760
    %v655 = vsub.f32 %v68, %v654
    %v656 = vand.u32 %v655, 4294901760
    %657 = vmatmul.mubr.f32.gmra.mxu0 %v656
    %v658 = vpop.f32.mrf.mxu0
    %v659 = vadd.f32 %v551, %v658
    %v660 = vpop.f32.mrf.mxu0
    %661 = vdwg.mxu0
    %662 = vmatprep.subr.mxu0 0.0
    %v663 = vand.u32 %v37, 4294901760
    %v664 = vsub.f32 %v37, %v663
    %v665 = vand.u32 %v664, 4294901760
    %666 = vmatpush1.msra.mxu0 %v665
    %667 = vmatprep.subr.mxu0 0.0
    %v668 = vand.u32 %v36, 4294901760
    %v669 = vsub.f32 %v36, %v668
    %v670 = vand.u32 %v669, 4294901760
    %671 = vmatpush1.msra.mxu0 %v670
    %672 = vmatprep.subr.mxu0 0.0
    %v673 = vand.u32 %v35, 4294901760
    %v674 = vsub.f32 %v35, %v673
    %v675 = vand.u32 %v674, 4294901760
    %676 = vmatpush1.msra.mxu0 %v675
    %677 = vmatprep.subr.mxu0 0.0
    %v678 = vand.u32 %v34, 4294901760
    %v679 = vsub.f32 %v34, %v678
    %v680 = vand.u32 %v679, 4294901760
    %681 = vmatpush1.msra.mxu0 %v680
    %682 = vmatprep.subr.mxu0 0.0
    %v683 = vand.u32 %v33, 4294901760
    %v684 = vsub.f32 %v33, %v683
    %v685 = vand.u32 %v684, 4294901760
    %686 = vmatpush1.msra.mxu0 %v685
    %687 = vmatprep.subr.mxu0 0.0
    %v688 = vand.u32 %v32, 4294901760
    %v689 = vsub.f32 %v32, %v688
    %v690 = vand.u32 %v689, 4294901760
    %691 = vmatpush1.msra.mxu0 %v690
    %692 = vmatprep.subr.mxu0 0.0
    %v693 = vand.u32 %v31, 4294901760
    %v694 = vsub.f32 %v31, %v693
    %v695 = vand.u32 %v694, 4294901760
    %696 = vmatpush1.msra.mxu0 %v695
    %697 = vmatprep.subr.mxu0 0.0
    %v698 = vand.u32 %v30, 4294901760
    %v699 = vsub.f32 %v30, %v698
    %v700 = vand.u32 %v699, 4294901760
    %701 = vmatpush1.msra.mxu0 %v700
    %702 = vmatprep.subr.mxu0 0.0
    %v703 = vand.u32 %v29, 4294901760
    %v704 = vsub.f32 %v29, %v703
    %v705 = vand.u32 %v704, 4294901760
    %706 = vmatpush1.msra.mxu0 %v705
    %707 = vmatprep.subr.mxu0 0.0
    %v708 = vand.u32 %v28, 4294901760
    %v709 = vsub.f32 %v28, %v708
    %v710 = vand.u32 %v709, 4294901760
    %711 = vmatpush1.msra.mxu0 %v710
    %712 = vmatprep.subr.mxu0 0.0
    %v713 = vand.u32 %v27, 4294901760
    %v714 = vsub.f32 %v27, %v713
    %v715 = vand.u32 %v714, 4294901760
    %716 = vmatpush1.msra.mxu0 %v715
    %717 = vmatprep.subr.mxu0 0.0
    %v718 = vand.u32 %v26, 4294901760
    %v719 = vsub.f32 %v26, %v718
    %v720 = vand.u32 %v719, 4294901760
    %721 = vmatpush1.msra.mxu0 %v720
    %722 = vmatprep.subr.mxu0 0.0
    %v723 = vand.u32 %v25, 4294901760
    %v724 = vsub.f32 %v25, %v723
    %v725 = vand.u32 %v724, 4294901760
    %726 = vmatpush1.msra.mxu0 %v725
    %727 = vmatprep.subr.mxu0 0.0
    %v728 = vand.u32 %v24, 4294901760
    %v729 = vsub.f32 %v24, %v728
    %v730 = vand.u32 %v729, 4294901760
    %731 = vmatpush1.msra.mxu0 %v730
    %732 = vmatprep.subr.mxu0 0.0
    %v733 = vand.u32 %v23, 4294901760
    %v734 = vsub.f32 %v23, %v733
    %v735 = vand.u32 %v734, 4294901760
    %736 = vmatpush1.msra.mxu0 %v735
    %737 = vmatprep.subr.mxu0 0.0
    %v738 = vand.u32 %v22, 4294901760
    %v739 = vsub.f32 %v22, %v738
    %v740 = vand.u32 %v739, 4294901760
    %741 = vmatpush1.msra.mxu0 %v740
    %742 = vmatprep.subr.mxu0 0.0
    %v743 = vand.u32 %v53, 4294901760
    %v744 = vsub.f32 %v53, %v743
    %v745 = vand.u32 %v744, 4294901760
    %746 = vmatpush2.msra.mxu0 %v745
    %747 = vmatprep.subr.mxu0 0.0
    %v748 = vand.u32 %v52, 4294901760
    %v749 = vsub.f32 %v52, %v748
    %v750 = vand.u32 %v749, 4294901760
    %751 = vmatpush2.msra.mxu0 %v750
    %752 = vmatprep.subr.mxu0 0.0
    %v753 = vand.u32 %v51, 4294901760
    %v754 = vsub.f32 %v51, %v753
    %v755 = vand.u32 %v754, 4294901760
    %756 = vmatpush2.msra.mxu0 %v755
    %757 = vmatprep.subr.mxu0 0.0
    %v758 = vand.u32 %v50, 4294901760
    %v759 = vsub.f32 %v50, %v758
    %v760 = vand.u32 %v759, 4294901760
    %761 = vmatpush2.msra.mxu0 %v760
    %762 = vmatprep.subr.mxu0 0.0
    %v763 = vand.u32 %v49, 4294901760
    %v764 = vsub.f32 %v49, %v763
    %v765 = vand.u32 %v764, 4294901760
    %766 = vmatpush2.msra.mxu0 %v765
    %767 = vmatprep.subr.mxu0 0.0
    %v768 = vand.u32 %v48, 4294901760
    %v769 = vsub.f32 %v48, %v768
    %v770 = vand.u32 %v769, 4294901760
    %771 = vmatpush2.msra.mxu0 %v770
    %772 = vmatprep.subr.mxu0 0.0
    %v773 = vand.u32 %v47, 4294901760
    %v774 = vsub.f32 %v47, %v773
    %v775 = vand.u32 %v774, 4294901760
    %776 = vmatpush2.msra.mxu0 %v775
    %777 = vmatprep.subr.mxu0 0.0
    %v778 = vand.u32 %v46, 4294901760
    %v779 = vsub.f32 %v46, %v778
    %v780 = vand.u32 %v779, 4294901760
    %781 = vmatpush2.msra.mxu0 %v780
    %782 = vmatprep.subr.mxu0 0.0
    %v783 = vand.u32 %v45, 4294901760
    %v784 = vsub.f32 %v45, %v783
    %v785 = vand.u32 %v784, 4294901760
    %786 = vmatpush2.msra.mxu0 %v785
    %787 = vmatprep.subr.mxu0 0.0
    %v788 = vand.u32 %v44, 4294901760
    %v789 = vsub.f32 %v44, %v788
    %v790 = vand.u32 %v789, 4294901760
    %791 = vmatpush2.msra.mxu0 %v790
    %792 = vmatprep.subr.mxu0 0.0
    %v793 = vand.u32 %v43, 4294901760
    %v794 = vsub.f32 %v43, %v793
    %v795 = vand.u32 %v794, 4294901760
    %796 = vmatpush2.msra.mxu0 %v795
    %797 = vmatprep.subr.mxu0 0.0
    %v798 = vand.u32 %v42, 4294901760
    %v799 = vsub.f32 %v42, %v798
    %v800 = vand.u32 %v799, 4294901760
    %801 = vmatpush2.msra.mxu0 %v800
    %802 = vmatprep.subr.mxu0 0.0
    %v803 = vand.u32 %v41, 4294901760
    %v804 = vsub.f32 %v41, %v803
    %v805 = vand.u32 %v804, 4294901760
    %806 = vmatpush2.msra.mxu0 %v805
    %807 = vmatprep.subr.mxu0 0.0
    %v808 = vand.u32 %v40, 4294901760
    %v809 = vsub.f32 %v40, %v808
    %v810 = vand.u32 %v809, 4294901760
    %811 = vmatpush2.msra.mxu0 %v810
    %812 = vmatprep.subr.mxu0 0.0
    %v813 = vand.u32 %v39, 4294901760
    %v814 = vsub.f32 %v39, %v813
    %v815 = vand.u32 %v814, 4294901760
    %816 = vmatpush2.msra.mxu0 %v815
    %817 = vmatprep.subr.mxu0 0.0
    %v818 = vand.u32 %v38, 4294901760
    %v819 = vsub.f32 %v38, %v818
    %v820 = vand.u32 %v819, 4294901760
    %821 = vmatpush2.msra.mxu0 %v820
    %v822 = vand.u32 %v69, 4294901760
    %823 = vmatprep.mubr.f32.mxu0 %v822
    %v824 = vand.u32 %v68, 4294901760
    %825 = vmatmul.mubr.f32.gmra.mxu0 %v824
    %v826 = vpop.f32.mrf.mxu0
    %v827 = vadd.f32 %v659, %v826
    %v828 = vpop.f32.mrf.mxu0
    %829 = vdwg.mxu0
    %830 = vmatprep.subr.mxu0 0.0
    %v831 = vand.u32 %v37, 4294901760
    %832 = vmatpush1.msra.mxu0 %v831
    %833 = vmatprep.subr.mxu0 0.0
    %v834 = vand.u32 %v36, 4294901760
    %835 = vmatpush1.msra.mxu0 %v834
    %836 = vmatprep.subr.mxu0 0.0
    %v837 = vand.u32 %v35, 4294901760
    %838 = vmatpush1.msra.mxu0 %v837
    %839 = vmatprep.subr.mxu0 0.0
    %v840 = vand.u32 %v34, 4294901760
    %841 = vmatpush1.msra.mxu0 %v840
    %842 = vmatprep.subr.mxu0 0.0
    %v843 = vand.u32 %v33, 4294901760
    %844 = vmatpush1.msra.mxu0 %v843
    %845 = vmatprep.subr.mxu0 0.0
    %v846 = vand.u32 %v32, 4294901760
    %847 = vmatpush1.msra.mxu0 %v846
    %848 = vmatprep.subr.mxu0 0.0
    %v849 = vand.u32 %v31, 4294901760
    %850 = vmatpush1.msra.mxu0 %v849
    %851 = vmatprep.subr.mxu0 0.0
    %v852 = vand.u32 %v30, 4294901760
    %853 = vmatpush1.msra.mxu0 %v852
    %854 = vmatprep.subr.mxu0 0.0
    %v855 = vand.u32 %v29, 4294901760
    %856 = vmatpush1.msra.mxu0 %v855
    %857 = vmatprep.subr.mxu0 0.0
    %v858 = vand.u32 %v28, 4294901760
    %859 = vmatpush1.msra.mxu0 %v858
    %860 = vmatprep.subr.mxu0 0.0
    %v861 = vand.u32 %v27, 4294901760
    %862 = vmatpush1.msra.mxu0 %v861
    %863 = vmatprep.subr.mxu0 0.0
    %v864 = vand.u32 %v26, 4294901760
    %865 = vmatpush1.msra.mxu0 %v864
    %866 = vmatprep.subr.mxu0 0.0
    %v867 = vand.u32 %v25, 4294901760
    %868 = vmatpush1.msra.mxu0 %v867
    %869 = vmatprep.subr.mxu0 0.0
    %v870 = vand.u32 %v24, 4294901760
    %871 = vmatpush1.msra.mxu0 %v870
    %872 = vmatprep.subr.mxu0 0.0
    %v873 = vand.u32 %v23, 4294901760
    %874 = vmatpush1.msra.mxu0 %v873
    %875 = vmatprep.subr.mxu0 0.0
    %v876 = vand.u32 %v22, 4294901760
    %877 = vmatpush1.msra.mxu0 %v876
    %878 = vmatprep.subr.mxu0 0.0
    %v879 = vand.u32 %v53, 4294901760
    %880 = vmatpush2.msra.mxu0 %v879
    %881 = vmatprep.subr.mxu0 0.0
    %v882 = vand.u32 %v52, 4294901760
    %883 = vmatpush2.msra.mxu0 %v882
    %884 = vmatprep.subr.mxu0 0.0
    %v885 = vand.u32 %v51, 4294901760
    %886 = vmatpush2.msra.mxu0 %v885
    %887 = vmatprep.subr.mxu0 0.0
    %v888 = vand.u32 %v50, 4294901760
    %889 = vmatpush2.msra.mxu0 %v888
    %890 = vmatprep.subr.mxu0 0.0
    %v891 = vand.u32 %v49, 4294901760
    %892 = vmatpush2.msra.mxu0 %v891
    %893 = vmatprep.subr.mxu0 0.0
    %v894 = vand.u32 %v48, 4294901760
    %895 = vmatpush2.msra.mxu0 %v894
    %896 = vmatprep.subr.mxu0 0.0
    %v897 = vand.u32 %v47, 4294901760
    %898 = vmatpush2.msra.mxu0 %v897
    %899 = vmatprep.subr.mxu0 0.0
    %v900 = vand.u32 %v46, 4294901760
    %901 = vmatpush2.msra.mxu0 %v900
    %902 = vmatprep.subr.mxu0 0.0
    %v903 = vand.u32 %v45, 4294901760
    %904 = vmatpush2.msra.mxu0 %v903
    %905 = vmatprep.subr.mxu0 0.0
    %v906 = vand.u32 %v44, 4294901760
    %907 = vmatpush2.msra.mxu0 %v906
    %908 = vmatprep.subr.mxu0 0.0
    %v909 = vand.u32 %v43, 4294901760
    %910 = vmatpush2.msra.mxu0 %v909
    %911 = vmatprep.subr.mxu0 0.0
    %v912 = vand.u32 %v42, 4294901760
    %913 = vmatpush2.msra.mxu0 %v912
    %914 = vmatprep.subr.mxu0 0.0
    %v915 = vand.u32 %v41, 4294901760
    %916 = vmatpush2.msra.mxu0 %v915
    %917 = vmatprep.subr.mxu0 0.0
    %v918 = vand.u32 %v40, 4294901760
    %919 = vmatpush2.msra.mxu0 %v918
    %920 = vmatprep.subr.mxu0 0.0
    %v921 = vand.u32 %v39, 4294901760
    %922 = vmatpush2.msra.mxu0 %v921
    %923 = vmatprep.subr.mxu0 0.0
    %v924 = vand.u32 %v38, 4294901760
    %925 = vmatpush2.msra.mxu0 %v924
    %v926 = vand.u32 %v69, 4294901760
    %927 = vmatprep.mubr.f32.mxu0 %v926
    %v928 = vand.u32 %v68, 4294901760
    %929 = vmatmul.mubr.f32.gmra.mxu0 %v928
    %v930 = vpop.f32.mrf.mxu0
    %v931 = vadd.f32 %v827, %v930
    %v932 = vpop.f32.mrf.mxu0
    %933 = vdwg.mxu0
    %v934 = vtanh.pop %v931
    %v935 = vmul.f32 %v934, 1.442695
    %v936 = vpow.pop %v935
    %vm937 = vcmask 58368
    %v938 = vsel %vm937, %v936, 0.0
    %939 = vadd.xlane.f32.xlu0 %v938
    %v940 = vpop.xlane.xlu0 %939
    %v941 = vadd.f32 %v940, 1e-10
    %v942 = vrcp.pop %v941
    %v943 = vmul.f32 %v936, %v942
    %v944 = vld [vmem:[%s3] sm:$0xff]
    %v945 = vld [vmem:[%s3 + $0x8] sm:$0xff]
    %vm946 = vcmask 64512
    %v948 = vsel %vm946, %v943, 0
    %950 = vmatprep.subr.mxu0 0.0
    %951 = vmatpush1.msra.mxu0 0.0
    %952 = vmatprep.subr.mxu0 0.0
    %953 = vmatpush1.msra.mxu0 0.0
    %954 = vmatprep.subr.mxu0 0.0
    %955 = vmatpush1.msra.mxu0 0.0
    %956 = vmatprep.subr.mxu0 0.0
    %957 = vmatpush1.msra.mxu0 0.0
    %958 = vmatprep.subr.mxu0 0.0
    %959 = vmatpush1.msra.mxu0 0.0
    %960 = vmatprep.subr.mxu0 0.0
    %961 = vmatpush1.msra.mxu0 0.0
    %962 = vmatprep.subr.mxu0 0.0
    %963 = vmatpush1.msra.mxu0 0.0
    %964 = vmatprep.subr.mxu0 0.0
    %965 = vmatpush1.msra.mxu0 0.0
    %966 = vmatprep.subr.mxu0 0.0
    %967 = vmatpush1.msra.mxu0 0.0
    %968 = vmatprep.subr.mxu0 0.0
    %969 = vmatpush1.msra.mxu0 0.0
    %970 = vmatprep.subr.mxu0 0.0
    %971 = vmatpush1.msra.mxu0 0.0
    %972 = vmatprep.subr.mxu0 0.0
    %973 = vmatpush1.msra.mxu0 0.0
    %974 = vmatprep.subr.mxu0 0.0
    %975 = vmatpush1.msra.mxu0 0.0
    %976 = vmatprep.subr.mxu0 0.0
    %977 = vmatpush1.msra.mxu0 0.0
    %978 = vmatprep.subr.mxu0 0.0
    %979 = vmatpush1.msra.mxu0 0.0
    %v980 = vand.u32 %v945, 4294901760
    %981 = vmatprep.subr.mxu0 %v980
    %v982 = vand.u32 %v944, 4294901760
    %983 = vmatpush1.msra.mxu0 %v982
    %984 = vmatprep.subr.mxu0 0.0
    %985 = vmatpush2.msra.mxu0 0.0
    %986 = vmatprep.subr.mxu0 0.0
    %987 = vmatpush2.msra.mxu0 0.0
    %988 = vmatprep.subr.mxu0 0.0
    %989 = vmatpush2.msra.mxu0 0.0
    %990 = vmatprep.subr.mxu0 0.0
    %991 = vmatpush2.msra.mxu0 0.0
    %992 = vmatprep.subr.mxu0 0.0
    %993 = vmatpush2.msra.mxu0 0.0
    %994 = vmatprep.subr.mxu0 0.0
    %995 = vmatpush2.msra.mxu0 0.0
    %996 = vmatprep.subr.mxu0 0.0
    %997 = vmatpush2.msra.mxu0 0.0
    %998 = vmatprep.subr.mxu0 0.0
    %999 = vmatpush2.msra.mxu0 0.0
    %1000 = vmatprep.subr.mxu0 0.0
    %1001 = vmatpush2.msra.mxu0 0.0
    %1002 = vmatprep.subr.mxu0 0.0
    %1003 = vmatpush2.msra.mxu0 0.0
    %1004 = vmatprep.subr.mxu0 0.0
    %1005 = vmatpush2.msra.mxu0 0.0
    %1006 = vmatprep.subr.mxu0 0.0
    %1007 = vmatpush2.msra.mxu0 0.0
    %1008 = vmatprep.subr.mxu0 0.0
    %1009 = vmatpush2.msra.mxu0 0.0
    %1010 = vmatprep.subr.mxu0 0.0
    %1011 = vmatpush2.msra.mxu0 0.0
    %1012 = vmatprep.subr.mxu0 0.0
    %1013 = vmatpush2.msra.mxu0 0.0
    %1014 = vmatprep.subr.mxu0 0.0
    %1015 = vmatpush2.msra.mxu0 0.0
    %1016 = vmatprep.mubr.f32.mxu0 0.0
    %v1017 = vand.u32 %v948, 4294901760
    %v1018 = vsub.f32 %v948, %v1017
    %v1019 = vand.u32 %v1018, 4294901760
    %v1020 = vsub.f32 %v1018, %v1019
    %v1021 = vand.u32 %v1020, 4294901760
    %1022 = vmatmul.mubr.f32.gmra.mxu0 %v1021
    %v1023 = vpop.f32.mrf.mxu0
    %v1024 = vadd.f32 0.0, %v1023
    %v1025 = vpop.f32.mrf.mxu0
    %v1026 = vadd.f32 0.0, %v1025
    %1027 = vdwg.mxu0
    %1028 = vmatprep.subr.mxu0 0.0
    %1029 = vmatpush1.msra.mxu0 0.0
    %1030 = vmatprep.subr.mxu0 0.0
    %1031 = vmatpush1.msra.mxu0 0.0
    %1032 = vmatprep.subr.mxu0 0.0
    %1033 = vmatpush1.msra.mxu0 0.0
    %1034 = vmatprep.subr.mxu0 0.0
    %1035 = vmatpush1.msra.mxu0 0.0
    %1036 = vmatprep.subr.mxu0 0.0
    %1037 = vmatpush1.msra.mxu0 0.0
    %1038 = vmatprep.subr.mxu0 0.0
    %1039 = vmatpush1.msra.mxu0 0.0
    %1040 = vmatprep.subr.mxu0 0.0
    %1041 = vmatpush1.msra.mxu0 0.0
    %1042 = vmatprep.subr.mxu0 0.0
    %1043 = vmatpush1.msra.mxu0 0.0
    %1044 = vmatprep.subr.mxu0 0.0
    %1045 = vmatpush1.msra.mxu0 0.0
    %1046 = vmatprep.subr.mxu0 0.0
    %1047 = vmatpush1.msra.mxu0 0.0
    %1048 = vmatprep.subr.mxu0 0.0
    %1049 = vmatpush1.msra.mxu0 0.0
    %1050 = vmatprep.subr.mxu0 0.0
    %1051 = vmatpush1.msra.mxu0 0.0
    %1052 = vmatprep.subr.mxu0 0.0
    %1053 = vmatpush1.msra.mxu0 0.0
    %1054 = vmatprep.subr.mxu0 0.0
    %1055 = vmatpush1.msra.mxu0 0.0
    %1056 = vmatprep.subr.mxu0 0.0
    %1057 = vmatpush1.msra.mxu0 0.0
    %v1058 = vand.u32 %v945, 4294901760
    %v1059 = vsub.f32 %v945, %v1058
    %v1060 = vand.u32 %v1059, 4294901760
    %v1061 = vsub.f32 %v1059, %v1060
    %v1062 = vand.u32 %v1061, 4294901760
    %1063 = vmatprep.subr.mxu0 %v1062
    %v1064 = vand.u32 %v944, 4294901760
    %v1065 = vsub.f32 %v944, %v1064
    %v1066 = vand.u32 %v1065, 4294901760
    %v1067 = vsub.f32 %v1065, %v1066
    %v1068 = vand.u32 %v1067, 4294901760
    %1069 = vmatpush1.msra.mxu0 %v1068
    %1070 = vmatprep.subr.mxu0 0.0
    %1071 = vmatpush2.msra.mxu0 0.0
    %1072 = vmatprep.subr.mxu0 0.0
    %1073 = vmatpush2.msra.mxu0 0.0
    %1074 = vmatprep.subr.mxu0 0.0
    %1075 = vmatpush2.msra.mxu0 0.0
    %1076 = vmatprep.subr.mxu0 0.0
    %1077 = vmatpush2.msra.mxu0 0.0
    %1078 = vmatprep.subr.mxu0 0.0
    %1079 = vmatpush2.msra.mxu0 0.0
    %1080 = vmatprep.subr.mxu0 0.0
    %1081 = vmatpush2.msra.mxu0 0.0
    %1082 = vmatprep.subr.mxu0 0.0
    %1083 = vmatpush2.msra.mxu0 0.0
    %1084 = vmatprep.subr.mxu0 0.0
    %1085 = vmatpush2.msra.mxu0 0.0
    %1086 = vmatprep.subr.mxu0 0.0
    %1087 = vmatpush2.msra.mxu0 0.0
    %1088 = vmatprep.subr.mxu0 0.0
    %1089 = vmatpush2.msra.mxu0 0.0
    %1090 = vmatprep.subr.mxu0 0.0
    %1091 = vmatpush2.msra.mxu0 0.0
    %1092 = vmatprep.subr.mxu0 0.0
    %1093 = vmatpush2.msra.mxu0 0.0
    %1094 = vmatprep.subr.mxu0 0.0
    %1095 = vmatpush2.msra.mxu0 0.0
    %1096 = vmatprep.subr.mxu0 0.0
    %1097 = vmatpush2.msra.mxu0 0.0
    %1098 = vmatprep.subr.mxu0 0.0
    %1099 = vmatpush2.msra.mxu0 0.0
    %1100 = vmatprep.subr.mxu0 0.0
    %1101 = vmatpush2.msra.mxu0 0.0
    %1102 = vmatprep.mubr.f32.mxu0 0.0
    %v1103 = vand.u32 %v948, 4294901760
    %1104 = vmatmul.mubr.f32.gmra.mxu0 %v1103
    %v1105 = vpop.f32.mrf.mxu0
    %v1106 = vadd.f32 %v1024, %v1105
    %v1107 = vpop.f32.mrf.mxu0
    %v1108 = vadd.f32 %v1026, %v1107
    %1109 = vdwg.mxu0
    %1110 = vmatprep.subr.mxu0 0.0
    %1111 = vmatpush1.msra.mxu0 0.0
    %1112 = vmatprep.subr.mxu0 0.0
    %1113 = vmatpush1.msra.mxu0 0.0
    %1114 = vmatprep.subr.mxu0 0.0
    %1115 = vmatpush1.msra.mxu0 0.0
    %1116 = vmatprep.subr.mxu0 0.0
    %1117 = vmatpush1.msra.mxu0 0.0
    %1118 = vmatprep.subr.mxu0 0.0
    %1119 = vmatpush1.msra.mxu0 0.0
    %1120 = vmatprep.subr.mxu0 0.0
    %1121 = vmatpush1.msra.mxu0 0.0
    %1122 = vmatprep.subr.mxu0 0.0
    %1123 = vmatpush1.msra.mxu0 0.0
    %1124 = vmatprep.subr.mxu0 0.0
    %1125 = vmatpush1.msra.mxu0 0.0
    %1126 = vmatprep.subr.mxu0 0.0
    %1127 = vmatpush1.msra.mxu0 0.0
    %1128 = vmatprep.subr.mxu0 0.0
    %1129 = vmatpush1.msra.mxu0 0.0
    %1130 = vmatprep.subr.mxu0 0.0
    %1131 = vmatpush1.msra.mxu0 0.0
    %1132 = vmatprep.subr.mxu0 0.0
    %1133 = vmatpush1.msra.mxu0 0.0
    %1134 = vmatprep.subr.mxu0 0.0
    %1135 = vmatpush1.msra.mxu0 0.0
    %1136 = vmatprep.subr.mxu0 0.0
    %1137 = vmatpush1.msra.mxu0 0.0
    %1138 = vmatprep.subr.mxu0 0.0
    %1139 = vmatpush1.msra.mxu0 0.0
    %v1140 = vand.u32 %v945, 4294901760
    %v1141 = vsub.f32 %v945, %v1140
    %1142 = vmatprep.subr.mxu0 %v1141
    %v1143 = vand.u32 %v944, 4294901760
    %v1144 = vsub.f32 %v944, %v1143
    %1145 = vmatpush1.msra.mxu0 %v1144
    %1146 = vmatprep.subr.mxu0 0.0
    %1147 = vmatpush2.msra.mxu0 0.0
    %1148 = vmatprep.subr.mxu0 0.0
    %1149 = vmatpush2.msra.mxu0 0.0
    %1150 = vmatprep.subr.mxu0 0.0
    %1151 = vmatpush2.msra.mxu0 0.0
    %1152 = vmatprep.subr.mxu0 0.0
    %1153 = vmatpush2.msra.mxu0 0.0
    %1154 = vmatprep.subr.mxu0 0.0
    %1155 = vmatpush2.msra.mxu0 0.0
    %1156 = vmatprep.subr.mxu0 0.0
    %1157 = vmatpush2.msra.mxu0 0.0
    %1158 = vmatprep.subr.mxu0 0.0
    %1159 = vmatpush2.msra.mxu0 0.0
    %1160 = vmatprep.subr.mxu0 0.0
    %1161 = vmatpush2.msra.mxu0 0.0
    %1162 = vmatprep.subr.mxu0 0.0
    %1163 = vmatpush2.msra.mxu0 0.0
    %1164 = vmatprep.subr.mxu0 0.0
    %1165 = vmatpush2.msra.mxu0 0.0
    %1166 = vmatprep.subr.mxu0 0.0
    %1167 = vmatpush2.msra.mxu0 0.0
    %1168 = vmatprep.subr.mxu0 0.0
    %1169 = vmatpush2.msra.mxu0 0.0
    %1170 = vmatprep.subr.mxu0 0.0
    %1171 = vmatpush2.msra.mxu0 0.0
    %1172 = vmatprep.subr.mxu0 0.0
    %1173 = vmatpush2.msra.mxu0 0.0
    %1174 = vmatprep.subr.mxu0 0.0
    %1175 = vmatpush2.msra.mxu0 0.0
    %1176 = vmatprep.subr.mxu0 0.0
    %1177 = vmatpush2.msra.mxu0 0.0
    %1178 = vmatprep.mubr.f32.mxu0 0.0
    %v1179 = vand.u32 %v948, 4294901760
    %v1180 = vsub.f32 %v948, %v1179
    %1181 = vmatmul.mubr.f32.gmra.mxu0 %v1180
    %v1182 = vpop.f32.mrf.mxu0
    %v1183 = vadd.f32 %v1106, %v1182
    %v1184 = vpop.f32.mrf.mxu0
    %v1185 = vadd.f32 %v1108, %v1184
    %1186 = vdwg.mxu0
    %1187 = vmatprep.subr.mxu0 0.0
    %1188 = vmatpush1.msra.mxu0 0.0
    %1189 = vmatprep.subr.mxu0 0.0
    %1190 = vmatpush1.msra.mxu0 0.0
    %1191 = vmatprep.subr.mxu0 0.0
    %1192 = vmatpush1.msra.mxu0 0.0
    %1193 = vmatprep.subr.mxu0 0.0
    %1194 = vmatpush1.msra.mxu0 0.0
    %1195 = vmatprep.subr.mxu0 0.0
    %1196 = vmatpush1.msra.mxu0 0.0
    %1197 = vmatprep.subr.mxu0 0.0
    %1198 = vmatpush1.msra.mxu0 0.0
    %1199 = vmatprep.subr.mxu0 0.0
    %1200 = vmatpush1.msra.mxu0 0.0
    %1201 = vmatprep.subr.mxu0 0.0
    %1202 = vmatpush1.msra.mxu0 0.0
    %1203 = vmatprep.subr.mxu0 0.0
    %1204 = vmatpush1.msra.mxu0 0.0
    %1205 = vmatprep.subr.mxu0 0.0
    %1206 = vmatpush1.msra.mxu0 0.0
    %1207 = vmatprep.subr.mxu0 0.0
    %1208 = vmatpush1.msra.mxu0 0.0
    %1209 = vmatprep.subr.mxu0 0.0
    %1210 = vmatpush1.msra.mxu0 0.0
    %1211 = vmatprep.subr.mxu0 0.0
    %1212 = vmatpush1.msra.mxu0 0.0
    %1213 = vmatprep.subr.mxu0 0.0
    %1214 = vmatpush1.msra.mxu0 0.0
    %1215 = vmatprep.subr.mxu0 0.0
    %1216 = vmatpush1.msra.mxu0 0.0
    %v1217 = vand.u32 %v945, 4294901760
    %1218 = vmatprep.subr.mxu0 %v1217
    %v1219 = vand.u32 %v944, 4294901760
    %1220 = vmatpush1.msra.mxu0 %v1219
    %1221 = vmatprep.subr.mxu0 0.0
    %1222 = vmatpush2.msra.mxu0 0.0
    %1223 = vmatprep.subr.mxu0 0.0
    %1224 = vmatpush2.msra.mxu0 0.0
    %1225 = vmatprep.subr.mxu0 0.0
    %1226 = vmatpush2.msra.mxu0 0.0
    %1227 = vmatprep.subr.mxu0 0.0
    %1228 = vmatpush2.msra.mxu0 0.0
    %1229 = vmatprep.subr.mxu0 0.0
    %1230 = vmatpush2.msra.mxu0 0.0
    %1231 = vmatprep.subr.mxu0 0.0
    %1232 = vmatpush2.msra.mxu0 0.0
    %1233 = vmatprep.subr.mxu0 0.0
    %1234 = vmatpush2.msra.mxu0 0.0
    %1235 = vmatprep.subr.mxu0 0.0
    %1236 = vmatpush2.msra.mxu0 0.0
    %1237 = vmatprep.subr.mxu0 0.0
    %1238 = vmatpush2.msra.mxu0 0.0
    %1239 = vmatprep.subr.mxu0 0.0
    %1240 = vmatpush2.msra.mxu0 0.0
    %1241 = vmatprep.subr.mxu0 0.0
    %1242 = vmatpush2.msra.mxu0 0.0
    %1243 = vmatprep.subr.mxu0 0.0
    %1244 = vmatpush2.msra.mxu0 0.0
    %1245 = vmatprep.subr.mxu0 0.0
    %1246 = vmatpush2.msra.mxu0 0.0
    %1247 = vmatprep.subr.mxu0 0.0
    %1248 = vmatpush2.msra.mxu0 0.0
    %1249 = vmatprep.subr.mxu0 0.0
    %1250 = vmatpush2.msra.mxu0 0.0
    %1251 = vmatprep.subr.mxu0 0.0
    %1252 = vmatpush2.msra.mxu0 0.0
    %1253 = vmatprep.mubr.f32.mxu0 0.0
    %v1254 = vand.u32 %v948, 4294901760
    %v1255 = vsub.f32 %v948, %v1254
    %v1256 = vand.u32 %v1255, 4294901760
    %1257 = vmatmul.mubr.f32.gmra.mxu0 %v1256
    %v1258 = vpop.f32.mrf.mxu0
    %v1259 = vadd.f32 %v1183, %v1258
    %v1260 = vpop.f32.mrf.mxu0
    %v1261 = vadd.f32 %v1185, %v1260
    %1262 = vdwg.mxu0
    %1263 = vmatprep.subr.mxu0 0.0
    %1264 = vmatpush1.msra.mxu0 0.0
    %1265 = vmatprep.subr.mxu0 0.0
    %1266 = vmatpush1.msra.mxu0 0.0
    %1267 = vmatprep.subr.mxu0 0.0
    %1268 = vmatpush1.msra.mxu0 0.0
    %1269 = vmatprep.subr.mxu0 0.0
    %1270 = vmatpush1.msra.mxu0 0.0
    %1271 = vmatprep.subr.mxu0 0.0
    %1272 = vmatpush1.msra.mxu0 0.0
    %1273 = vmatprep.subr.mxu0 0.0
    %1274 = vmatpush1.msra.mxu0 0.0
    %1275 = vmatprep.subr.mxu0 0.0
    %1276 = vmatpush1.msra.mxu0 0.0
    %1277 = vmatprep.subr.mxu0 0.0
    %1278 = vmatpush1.msra.mxu0 0.0
    %1279 = vmatprep.subr.mxu0 0.0
    %1280 = vmatpush1.msra.mxu0 0.0
    %1281 = vmatprep.subr.mxu0 0.0
    %1282 = vmatpush1.msra.mxu0 0.0
    %1283 = vmatprep.subr.mxu0 0.0
    %1284 = vmatpush1.msra.mxu0 0.0
    %1285 = vmatprep.subr.mxu0 0.0
    %1286 = vmatpush1.msra.mxu0 0.0
    %1287 = vmatprep.subr.mxu0 0.0
    %1288 = vmatpush1.msra.mxu0 0.0
    %1289 = vmatprep.subr.mxu0 0.0
    %1290 = vmatpush1.msra.mxu0 0.0
    %1291 = vmatprep.subr.mxu0 0.0
    %1292 = vmatpush1.msra.mxu0 0.0
    %v1293 = vand.u32 %v945, 4294901760
    %v1294 = vsub.f32 %v945, %v1293
    %v1295 = vand.u32 %v1294, 4294901760
    %1296 = vmatprep.subr.mxu0 %v1295
    %v1297 = vand.u32 %v944, 4294901760
    %v1298 = vsub.f32 %v944, %v1297
    %v1299 = vand.u32 %v1298, 4294901760
    %1300 = vmatpush1.msra.mxu0 %v1299
    %1301 = vmatprep.subr.mxu0 0.0
    %1302 = vmatpush2.msra.mxu0 0.0
    %1303 = vmatprep.subr.mxu0 0.0
    %1304 = vmatpush2.msra.mxu0 0.0
    %1305 = vmatprep.subr.mxu0 0.0
    %1306 = vmatpush2.msra.mxu0 0.0
    %1307 = vmatprep.subr.mxu0 0.0
    %1308 = vmatpush2.msra.mxu0 0.0
    %1309 = vmatprep.subr.mxu0 0.0
    %1310 = vmatpush2.msra.mxu0 0.0
    %1311 = vmatprep.subr.mxu0 0.0
    %1312 = vmatpush2.msra.mxu0 0.0
    %1313 = vmatprep.subr.mxu0 0.0
    %1314 = vmatpush2.msra.mxu0 0.0
    %1315 = vmatprep.subr.mxu0 0.0
    %1316 = vmatpush2.msra.mxu0 0.0
    %1317 = vmatprep.subr.mxu0 0.0
    %1318 = vmatpush2.msra.mxu0 0.0
    %1319 = vmatprep.subr.mxu0 0.0
    %1320 = vmatpush2.msra.mxu0 0.0
    %1321 = vmatprep.subr.mxu0 0.0
    %1322 = vmatpush2.msra.mxu0 0.0
    %1323 = vmatprep.subr.mxu0 0.0
    %1324 = vmatpush2.msra.mxu0 0.0
    %1325 = vmatprep.subr.mxu0 0.0
    %1326 = vmatpush2.msra.mxu0 0.0
    %1327 = vmatprep.subr.mxu0 0.0
    %1328 = vmatpush2.msra.mxu0 0.0
    %1329 = vmatprep.subr.mxu0 0.0
    %1330 = vmatpush2.msra.mxu0 0.0
    %1331 = vmatprep.subr.mxu0 0.0
    %1332 = vmatpush2.msra.mxu0 0.0
    %1333 = vmatprep.mubr.f32.mxu0 0.0
    %v1334 = vand.u32 %v948, 4294901760
    %1335 = vmatmul.mubr.f32.gmra.mxu0 %v1334
    %v1336 = vpop.f32.mrf.mxu0
    %v1337 = vadd.f32 %v1259, %v1336
    %v1338 = vpop.f32.mrf.mxu0
    %v1339 = vadd.f32 %v1261, %v1338
    %1340 = vdwg.mxu0
    %1341 = vmatprep.subr.mxu0 0.0
    %1342 = vmatpush1.msra.mxu0 0.0
    %1343 = vmatprep.subr.mxu0 0.0
    %1344 = vmatpush1.msra.mxu0 0.0
    %1345 = vmatprep.subr.mxu0 0.0
    %1346 = vmatpush1.msra.mxu0 0.0
    %1347 = vmatprep.subr.mxu0 0.0
    %1348 = vmatpush1.msra.mxu0 0.0
    %1349 = vmatprep.subr.mxu0 0.0
    %1350 = vmatpush1.msra.mxu0 0.0
    %1351 = vmatprep.subr.mxu0 0.0
    %1352 = vmatpush1.msra.mxu0 0.0
    %1353 = vmatprep.subr.mxu0 0.0
    %1354 = vmatpush1.msra.mxu0 0.0
    %1355 = vmatprep.subr.mxu0 0.0
    %1356 = vmatpush1.msra.mxu0 0.0
    %1357 = vmatprep.subr.mxu0 0.0
    %1358 = vmatpush1.msra.mxu0 0.0
    %1359 = vmatprep.subr.mxu0 0.0
    %1360 = vmatpush1.msra.mxu0 0.0
    %1361 = vmatprep.subr.mxu0 0.0
    %1362 = vmatpush1.msra.mxu0 0.0
    %1363 = vmatprep.subr.mxu0 0.0
    %1364 = vmatpush1.msra.mxu0 0.0
    %1365 = vmatprep.subr.mxu0 0.0
    %1366 = vmatpush1.msra.mxu0 0.0
    %1367 = vmatprep.subr.mxu0 0.0
    %1368 = vmatpush1.msra.mxu0 0.0
    %1369 = vmatprep.subr.mxu0 0.0
    %1370 = vmatpush1.msra.mxu0 0.0
    %v1371 = vand.u32 %v945, 4294901760
    %1372 = vmatprep.subr.mxu0 %v1371
    %v1373 = vand.u32 %v944, 4294901760
    %1374 = vmatpush1.msra.mxu0 %v1373
    %1375 = vmatprep.subr.mxu0 0.0
    %1376 = vmatpush2.msra.mxu0 0.0
    %1377 = vmatprep.subr.mxu0 0.0
    %1378 = vmatpush2.msra.mxu0 0.0
    %1379 = vmatprep.subr.mxu0 0.0
    %1380 = vmatpush2.msra.mxu0 0.0
    %1381 = vmatprep.subr.mxu0 0.0
    %1382 = vmatpush2.msra.mxu0 0.0
    %1383 = vmatprep.subr.mxu0 0.0
    %1384 = vmatpush2.msra.mxu0 0.0
    %1385 = vmatprep.subr.mxu0 0.0
    %1386 = vmatpush2.msra.mxu0 0.0
    %1387 = vmatprep.subr.mxu0 0.0
    %1388 = vmatpush2.msra.mxu0 0.0
    %1389 = vmatprep.subr.mxu0 0.0
    %1390 = vmatpush2.msra.mxu0 0.0
    %1391 = vmatprep.subr.mxu0 0.0
    %1392 = vmatpush2.msra.mxu0 0.0
    %1393 = vmatprep.subr.mxu0 0.0
    %1394 = vmatpush2.msra.mxu0 0.0
    %1395 = vmatprep.subr.mxu0 0.0
    %1396 = vmatpush2.msra.mxu0 0.0
    %1397 = vmatprep.subr.mxu0 0.0
    %1398 = vmatpush2.msra.mxu0 0.0
    %1399 = vmatprep.subr.mxu0 0.0
    %1400 = vmatpush2.msra.mxu0 0.0
    %1401 = vmatprep.subr.mxu0 0.0
    %1402 = vmatpush2.msra.mxu0 0.0
    %1403 = vmatprep.subr.mxu0 0.0
    %1404 = vmatpush2.msra.mxu0 0.0
    %1405 = vmatprep.subr.mxu0 0.0
    %1406 = vmatpush2.msra.mxu0 0.0
    %1407 = vmatprep.mubr.f32.mxu0 0.0
    %v1408 = vand.u32 %v948, 4294901760
    %1409 = vmatmul.mubr.f32.gmra.mxu0 %v1408
    %v1410 = vpop.f32.mrf.mxu0
    %v1411 = vadd.f32 %v1337, %v1410
    %v1412 = vpop.f32.mrf.mxu0
    %v1413 = vadd.f32 %v1339, %v1412
    %1414 = vdwg.mxu0
    %v1417 = vcombine.low %v1411, %v1413
    %v1419 = vunpack.c.l.s4 1983009808
    %v1420 = vunpack.c.0.s8 %v1419
    %v1421 = vlaneseq
    %v1422 = vshrl.u32 %v1421, 7
    %v1423 = vsub.s32 %v1420, %v1422
    %v1424 = vrot.slane %v1417, %v1423
    %v1426 = vmul.f32 %v21, %v1424
    %v1427 = vld [vmem:[%s4] sm:$0xff]
    %v1428 = vld [vmem:[%s4 + $0x8] sm:$0xff]
    %v1429 = vld [vmem:[%s4 + $0x10] sm:$0xff]
    %v1430 = vld [vmem:[%s4 + $0x18] sm:$0xff]
    %v1431 = vld [vmem:[%s4 + $0x20] sm:$0xff]
    %v1432 = vld [vmem:[%s4 + $0x28] sm:$0xff]
    %v1433 = vld [vmem:[%s4 + $0x30] sm:$0xff]
    %v1434 = vld [vmem:[%s4 + $0x38] sm:$0xff]
    %v1435 = vld [vmem:[%s4 + $0x40] sm:$0xff]
    %v1436 = vld [vmem:[%s4 + $0x48] sm:$0xff]
    %v1437 = vld [vmem:[%s4 + $0x50] sm:$0xff]
    %v1438 = vld [vmem:[%s4 + $0x58] sm:$0xff]
    %v1439 = vld [vmem:[%s4 + $0x60] sm:$0xff]
    %v1440 = vld [vmem:[%s4 + $0x68] sm:$0xff]
    %v1441 = vld [vmem:[%s4 + $0x70] sm:$0xff]
    %v1442 = vld [vmem:[%s4 + $0x78] sm:$0xff]
    %v1443 = vld [vmem:[%s4 + $0x80] sm:$0xff]
    %v1444 = vld [vmem:[%s4 + $0x88] sm:$0xff]
    %v1445 = vld [vmem:[%s4 + $0x90] sm:$0xff]
    %v1446 = vld [vmem:[%s4 + $0x98] sm:$0xff]
    %v1447 = vld [vmem:[%s4 + $0xa0] sm:$0xff]
    %v1448 = vld [vmem:[%s4 + $0xa8] sm:$0xff]
    %v1449 = vld [vmem:[%s4 + $0xb0] sm:$0xff]
    %v1450 = vld [vmem:[%s4 + $0xb8] sm:$0xff]
    %v1451 = vld [vmem:[%s4 + $0xc0] sm:$0xff]
    %v1452 = vld [vmem:[%s4 + $0xc8] sm:$0xff]
    %v1453 = vld [vmem:[%s4 + $0xd0] sm:$0xff]
    %v1454 = vld [vmem:[%s4 + $0xd8] sm:$0xff]
    %v1455 = vld [vmem:[%s4 + $0xe0] sm:$0xff]
    %v1456 = vld [vmem:[%s4 + $0xe8] sm:$0xff]
    %v1457 = vld [vmem:[%s4 + $0xf0] sm:$0xff]
    %v1458 = vld [vmem:[%s4 + $0xf8] sm:$0xff]
    %v1461 = vunpack.c.l.s4 1983009808
    %v1462 = vunpack.c.0.s8 %v1461
    %v1463 = vlaneseq
    %v1464 = vshrl.u32 %v1463, 7
    %v1465 = vsub.s32 %v1462, %v1464
    %v1466 = vrot.slane %v1426, %v1465
    %v1467 = vcombine.high %v1466, %v1466
    %1470 = vmatprep.subr.mxu0 0.0
    %v1471 = vand.u32 %v1442, 4294901760
    %1472 = vmatpush1.msra.mxu0 %v1471
    %1473 = vmatprep.subr.mxu0 0.0
    %v1474 = vand.u32 %v1441, 4294901760
    %1475 = vmatpush1.msra.mxu0 %v1474
    %1476 = vmatprep.subr.mxu0 0.0
    %v1477 = vand.u32 %v1440, 4294901760
    %1478 = vmatpush1.msra.mxu0 %v1477
    %1479 = vmatprep.subr.mxu0 0.0
    %v1480 = vand.u32 %v1439, 4294901760
    %1481 = vmatpush1.msra.mxu0 %v1480
    %1482 = vmatprep.subr.mxu0 0.0
    %v1483 = vand.u32 %v1438, 4294901760
    %1484 = vmatpush1.msra.mxu0 %v1483
    %1485 = vmatprep.subr.mxu0 0.0
    %v1486 = vand.u32 %v1437, 4294901760
    %1487 = vmatpush1.msra.mxu0 %v1486
    %1488 = vmatprep.subr.mxu0 0.0
    %v1489 = vand.u32 %v1436, 4294901760
    %1490 = vmatpush1.msra.mxu0 %v1489
    %1491 = vmatprep.subr.mxu0 0.0
    %v1492 = vand.u32 %v1435, 4294901760
    %1493 = vmatpush1.msra.mxu0 %v1492
    %1494 = vmatprep.subr.mxu0 0.0
    %v1495 = vand.u32 %v1434, 4294901760
    %1496 = vmatpush1.msra.mxu0 %v1495
    %1497 = vmatprep.subr.mxu0 0.0
    %v1498 = vand.u32 %v1433, 4294901760
    %1499 = vmatpush1.msra.mxu0 %v1498
    %1500 = vmatprep.subr.mxu0 0.0
    %v1501 = vand.u32 %v1432, 4294901760
    %1502 = vmatpush1.msra.mxu0 %v1501
    %1503 = vmatprep.subr.mxu0 0.0
    %v1504 = vand.u32 %v1431, 4294901760
    %1505 = vmatpush1.msra.mxu0 %v1504
    %1506 = vmatprep.subr.mxu0 0.0
    %v1507 = vand.u32 %v1430, 4294901760
    %1508 = vmatpush1.msra.mxu0 %v1507
    %1509 = vmatprep.subr.mxu0 0.0
    %v1510 = vand.u32 %v1429, 4294901760
    %1511 = vmatpush1.msra.mxu0 %v1510
    %1512 = vmatprep.subr.mxu0 0.0
    %v1513 = vand.u32 %v1428, 4294901760
    %1514 = vmatpush1.msra.mxu0 %v1513
    %1515 = vmatprep.subr.mxu0 0.0
    %v1516 = vand.u32 %v1427, 4294901760
    %1517 = vmatpush1.msra.mxu0 %v1516
    %1518 = vmatprep.subr.mxu0 0.0
    %v1519 = vand.u32 %v1458, 4294901760
    %1520 = vmatpush2.msra.mxu0 %v1519
    %1521 = vmatprep.subr.mxu0 0.0
    %v1522 = vand.u32 %v1457, 4294901760
    %1523 = vmatpush2.msra.mxu0 %v1522
    %1524 = vmatprep.subr.mxu0 0.0
    %v1525 = vand.u32 %v1456, 4294901760
    %1526 = vmatpush2.msra.mxu0 %v1525
    %1527 = vmatprep.subr.mxu0 0.0
    %v1528 = vand.u32 %v1455, 4294901760
    %1529 = vmatpush2.msra.mxu0 %v1528
    %1530 = vmatprep.subr.mxu0 0.0
    %v1531 = vand.u32 %v1454, 4294901760
    %1532 = vmatpush2.msra.mxu0 %v1531
    %1533 = vmatprep.subr.mxu0 0.0
    %v1534 = vand.u32 %v1453, 4294901760
    %1535 = vmatpush2.msra.mxu0 %v1534
    %1536 = vmatprep.subr.mxu0 0.0
    %v1537 = vand.u32 %v1452, 4294901760
    %1538 = vmatpush2.msra.mxu0 %v1537
    %1539 = vmatprep.subr.mxu0 0.0
    %v1540 = vand.u32 %v1451, 4294901760
    %1541 = vmatpush2.msra.mxu0 %v1540
    %1542 = vmatprep.subr.mxu0 0.0
    %v1543 = vand.u32 %v1450, 4294901760
    %1544 = vmatpush2.msra.mxu0 %v1543
    %1545 = vmatprep.subr.mxu0 0.0
    %v1546 = vand.u32 %v1449, 4294901760
    %1547 = vmatpush2.msra.mxu0 %v1546
    %1548 = vmatprep.subr.mxu0 0.0
    %v1549 = vand.u32 %v1448, 4294901760
    %1550 = vmatpush2.msra.mxu0 %v1549
    %1551 = vmatprep.subr.mxu0 0.0
    %v1552 = vand.u32 %v1447, 4294901760
    %1553 = vmatpush2.msra.mxu0 %v1552
    %1554 = vmatprep.subr.mxu0 0.0
    %v1555 = vand.u32 %v1446, 4294901760
    %1556 = vmatpush2.msra.mxu0 %v1555
    %1557 = vmatprep.subr.mxu0 0.0
    %v1558 = vand.u32 %v1445, 4294901760
    %1559 = vmatpush2.msra.mxu0 %v1558
    %1560 = vmatprep.subr.mxu0 0.0
    %v1561 = vand.u32 %v1444, 4294901760
    %1562 = vmatpush2.msra.mxu0 %v1561
    %1563 = vmatprep.subr.mxu0 0.0
    %v1564 = vand.u32 %v1443, 4294901760
    %1565 = vmatpush2.msra.mxu0 %v1564
    %v1566 = vand.u32 %v1467, 4294901760
    %v1567 = vsub.f32 %v1467, %v1566
    %v1568 = vand.u32 %v1567, 4294901760
    %v1569 = vsub.f32 %v1567, %v1568
    %v1570 = vand.u32 %v1569, 4294901760
    %1571 = vmatprep.mubr.f32.mxu0 %v1570
    %v1572 = vand.u32 %v1466, 4294901760
    %v1573 = vsub.f32 %v1466, %v1572
    %v1574 = vand.u32 %v1573, 4294901760
    %v1575 = vsub.f32 %v1573, %v1574
    %v1576 = vand.u32 %v1575, 4294901760
    %1577 = vmatmul.mubr.f32.gmra.mxu0 %v1576
    %v1578 = vpop.f32.mrf.mxu0
    %v1579 = vadd.f32 0.0, %v1578
    %v1580 = vpop.f32.mrf.mxu0
    %1581 = vdwg.mxu0
    %1582 = vmatprep.subr.mxu0 0.0
    %v1583 = vand.u32 %v1442, 4294901760
    %v1584 = vsub.f32 %v1442, %v1583
    %v1585 = vand.u32 %v1584, 4294901760
    %v1586 = vsub.f32 %v1584, %v1585
    %v1587 = vand.u32 %v1586, 4294901760
    %1588 = vmatpush1.msra.mxu0 %v1587
    %1589 = vmatprep.subr.mxu0 0.0
    %v1590 = vand.u32 %v1441, 4294901760
    %v1591 = vsub.f32 %v1441, %v1590
    %v1592 = vand.u32 %v1591, 4294901760
    %v1593 = vsub.f32 %v1591, %v1592
    %v1594 = vand.u32 %v1593, 4294901760
    %1595 = vmatpush1.msra.mxu0 %v1594
    %1596 = vmatprep.subr.mxu0 0.0
    %v1597 = vand.u32 %v1440, 4294901760
    %v1598 = vsub.f32 %v1440, %v1597
    %v1599 = vand.u32 %v1598, 4294901760
    %v1600 = vsub.f32 %v1598, %v1599
    %v1601 = vand.u32 %v1600, 4294901760
    %1602 = vmatpush1.msra.mxu0 %v1601
    %1603 = vmatprep.subr.mxu0 0.0
    %v1604 = vand.u32 %v1439, 4294901760
    %v1605 = vsub.f32 %v1439, %v1604
    %v1606 = vand.u32 %v1605, 4294901760
    %v1607 = vsub.f32 %v1605, %v1606
    %v1608 = vand.u32 %v1607, 4294901760
    %1609 = vmatpush1.msra.mxu0 %v1608
    %1610 = vmatprep.subr.mxu0 0.0
    %v1611 = vand.u32 %v1438, 4294901760
    %v1612 = vsub.f32 %v1438, %v1611
    %v1613 = vand.u32 %v1612, 4294901760
    %v1614 = vsub.f32 %v1612, %v1613
    %v1615 = vand.u32 %v1614, 4294901760
    %1616 = vmatpush1.msra.mxu0 %v1615
    %1617 = vmatprep.subr.mxu0 0.0
    %v1618 = vand.u32 %v1437, 4294901760
    %v1619 = vsub.f32 %v1437, %v1618
    %v1620 = vand.u32 %v1619, 4294901760
    %v1621 = vsub.f32 %v1619, %v1620
    %v1622 = vand.u32 %v1621, 4294901760
    %1623 = vmatpush1.msra.mxu0 %v1622
    %1624 = vmatprep.subr.mxu0 0.0
    %v1625 = vand.u32 %v1436, 4294901760
    %v1626 = vsub.f32 %v1436, %v1625
    %v1627 = vand.u32 %v1626, 4294901760
    %v1628 = vsub.f32 %v1626, %v1627
    %v1629 = vand.u32 %v1628, 4294901760
    %1630 = vmatpush1.msra.mxu0 %v1629
    %1631 = vmatprep.subr.mxu0 0.0
    %v1632 = vand.u32 %v1435, 4294901760
    %v1633 = vsub.f32 %v1435, %v1632
    %v1634 = vand.u32 %v1633, 4294901760
    %v1635 = vsub.f32 %v1633, %v1634
    %v1636 = vand.u32 %v1635, 4294901760
    %1637 = vmatpush1.msra.mxu0 %v1636
    %1638 = vmatprep.subr.mxu0 0.0
    %v1639 = vand.u32 %v1434, 4294901760
    %v1640 = vsub.f32 %v1434, %v1639
    %v1641 = vand.u32 %v1640, 4294901760
    %v1642 = vsub.f32 %v1640, %v1641
    %v1643 = vand.u32 %v1642, 4294901760
    %1644 = vmatpush1.msra.mxu0 %v1643
    %1645 = vmatprep.subr.mxu0 0.0
    %v1646 = vand.u32 %v1433, 4294901760
    %v1647 = vsub.f32 %v1433, %v1646
    %v1648 = vand.u32 %v1647, 4294901760
    %v1649 = vsub.f32 %v1647, %v1648
    %v1650 = vand.u32 %v1649, 4294901760
    %1651 = vmatpush1.msra.mxu0 %v1650
    %1652 = vmatprep.subr.mxu0 0.0
    %v1653 = vand.u32 %v1432, 4294901760
    %v1654 = vsub.f32 %v1432, %v1653
    %v1655 = vand.u32 %v1654, 4294901760
    %v1656 = vsub.f32 %v1654, %v1655
    %v1657 = vand.u32 %v1656, 4294901760
    %1658 = vmatpush1.msra.mxu0 %v1657
    %1659 = vmatprep.subr.mxu0 0.0
    %v1660 = vand.u32 %v1431, 4294901760
    %v1661 = vsub.f32 %v1431, %v1660
    %v1662 = vand.u32 %v1661, 4294901760
    %v1663 = vsub.f32 %v1661, %v1662
    %v1664 = vand.u32 %v1663, 4294901760
    %1665 = vmatpush1.msra.mxu0 %v1664
    %1666 = vmatprep.subr.mxu0 0.0
    %v1667 = vand.u32 %v1430, 4294901760
    %v1668 = vsub.f32 %v1430, %v1667
    %v1669 = vand.u32 %v1668, 4294901760
    %v1670 = vsub.f32 %v1668, %v1669
    %v1671 = vand.u32 %v1670, 4294901760
    %1672 = vmatpush1.msra.mxu0 %v1671
    %1673 = vmatprep.subr.mxu0 0.0
    %v1674 = vand.u32 %v1429, 4294901760
    %v1675 = vsub.f32 %v1429, %v1674
    %v1676 = vand.u32 %v1675, 4294901760
    %v1677 = vsub.f32 %v1675, %v1676
    %v1678 = vand.u32 %v1677, 4294901760
    %1679 = vmatpush1.msra.mxu0 %v1678
    %1680 = vmatprep.subr.mxu0 0.0
    %v1681 = vand.u32 %v1428, 4294901760
    %v1682 = vsub.f32 %v1428, %v1681
    %v1683 = vand.u32 %v1682, 4294901760
    %v1684 = vsub.f32 %v1682, %v1683
    %v1685 = vand.u32 %v1684, 4294901760
    %1686 = vmatpush1.msra.mxu0 %v1685
    %1687 = vmatprep.subr.mxu0 0.0
    %v1688 = vand.u32 %v1427, 4294901760
    %v1689 = vsub.f32 %v1427, %v1688
    %v1690 = vand.u32 %v1689, 4294901760
    %v1691 = vsub.f32 %v1689, %v1690
    %v1692 = vand.u32 %v1691, 4294901760
    %1693 = vmatpush1.msra.mxu0 %v1692
    %1694 = vmatprep.subr.mxu0 0.0
    %v1695 = vand.u32 %v1458, 4294901760
    %v1696 = vsub.f32 %v1458, %v1695
    %v1697 = vand.u32 %v1696, 4294901760
    %v1698 = vsub.f32 %v1696, %v1697
    %v1699 = vand.u32 %v1698, 4294901760
    %1700 = vmatpush2.msra.mxu0 %v1699
    %1701 = vmatprep.subr.mxu0 0.0
    %v1702 = vand.u32 %v1457, 4294901760
    %v1703 = vsub.f32 %v1457, %v1702
    %v1704 = vand.u32 %v1703, 4294901760
    %v1705 = vsub.f32 %v1703, %v1704
    %v1706 = vand.u32 %v1705, 4294901760
    %1707 = vmatpush2.msra.mxu0 %v1706
    %1708 = vmatprep.subr.mxu0 0.0
    %v1709 = vand.u32 %v1456, 4294901760
    %v1710 = vsub.f32 %v1456, %v1709
    %v1711 = vand.u32 %v1710, 4294901760
    %v1712 = vsub.f32 %v1710, %v1711
    %v1713 = vand.u32 %v1712, 4294901760
    %1714 = vmatpush2.msra.mxu0 %v1713
    %1715 = vmatprep.subr.mxu0 0.0
    %v1716 = vand.u32 %v1455, 4294901760
    %v1717 = vsub.f32 %v1455, %v1716
    %v1718 = vand.u32 %v1717, 4294901760
    %v1719 = vsub.f32 %v1717, %v1718
    %v1720 = vand.u32 %v1719, 4294901760
    %1721 = vmatpush2.msra.mxu0 %v1720
    %1722 = vmatprep.subr.mxu0 0.0
    %v1723 = vand.u32 %v1454, 4294901760
    %v1724 = vsub.f32 %v1454, %v1723
    %v1725 = vand.u32 %v1724, 4294901760
    %v1726 = vsub.f32 %v1724, %v1725
    %v1727 = vand.u32 %v1726, 4294901760
    %1728 = vmatpush2.msra.mxu0 %v1727
    %1729 = vmatprep.subr.mxu0 0.0
    %v1730 = vand.u32 %v1453, 4294901760
    %v1731 = vsub.f32 %v1453, %v1730
    %v1732 = vand.u32 %v1731, 4294901760
    %v1733 = vsub.f32 %v1731, %v1732
    %v1734 = vand.u32 %v1733, 4294901760
    %1735 = vmatpush2.msra.mxu0 %v1734
    %1736 = vmatprep.subr.mxu0 0.0
    %v1737 = vand.u32 %v1452, 4294901760
    %v1738 = vsub.f32 %v1452, %v1737
    %v1739 = vand.u32 %v1738, 4294901760
    %v1740 = vsub.f32 %v1738, %v1739
    %v1741 = vand.u32 %v1740, 4294901760
    %1742 = vmatpush2.msra.mxu0 %v1741
    %1743 = vmatprep.subr.mxu0 0.0
    %v1744 = vand.u32 %v1451, 4294901760
    %v1745 = vsub.f32 %v1451, %v1744
    %v1746 = vand.u32 %v1745, 4294901760
    %v1747 = vsub.f32 %v1745, %v1746
    %v1748 = vand.u32 %v1747, 4294901760
    %1749 = vmatpush2.msra.mxu0 %v1748
    %1750 = vmatprep.subr.mxu0 0.0
    %v1751 = vand.u32 %v1450, 4294901760
    %v1752 = vsub.f32 %v1450, %v1751
    %v1753 = vand.u32 %v1752, 4294901760
    %v1754 = vsub.f32 %v1752, %v1753
    %v1755 = vand.u32 %v1754, 4294901760
    %1756 = vmatpush2.msra.mxu0 %v1755
    %1757 = vmatprep.subr.mxu0 0.0
    %v1758 = vand.u32 %v1449, 4294901760
    %v1759 = vsub.f32 %v1449, %v1758
    %v1760 = vand.u32 %v1759, 4294901760
    %v1761 = vsub.f32 %v1759, %v1760
    %v1762 = vand.u32 %v1761, 4294901760
    %1763 = vmatpush2.msra.mxu0 %v1762
    %1764 = vmatprep.subr.mxu0 0.0
    %v1765 = vand.u32 %v1448, 4294901760
    %v1766 = vsub.f32 %v1448, %v1765
    %v1767 = vand.u32 %v1766, 4294901760
    %v1768 = vsub.f32 %v1766, %v1767
    %v1769 = vand.u32 %v1768, 4294901760
    %1770 = vmatpush2.msra.mxu0 %v1769
    %1771 = vmatprep.subr.mxu0 0.0
    %v1772 = vand.u32 %v1447, 4294901760
    %v1773 = vsub.f32 %v1447, %v1772
    %v1774 = vand.u32 %v1773, 4294901760
    %v1775 = vsub.f32 %v1773, %v1774
    %v1776 = vand.u32 %v1775, 4294901760
    %1777 = vmatpush2.msra.mxu0 %v1776
    %1778 = vmatprep.subr.mxu0 0.0
    %v1779 = vand.u32 %v1446, 4294901760
    %v1780 = vsub.f32 %v1446, %v1779
    %v1781 = vand.u32 %v1780, 4294901760
    %v1782 = vsub.f32 %v1780, %v1781
    %v1783 = vand.u32 %v1782, 4294901760
    %1784 = vmatpush2.msra.mxu0 %v1783
    %1785 = vmatprep.subr.mxu0 0.0
    %v1786 = vand.u32 %v1445, 4294901760
    %v1787 = vsub.f32 %v1445, %v1786
    %v1788 = vand.u32 %v1787, 4294901760
    %v1789 = vsub.f32 %v1787, %v1788
    %v1790 = vand.u32 %v1789, 4294901760
    %1791 = vmatpush2.msra.mxu0 %v1790
    %1792 = vmatprep.subr.mxu0 0.0
    %v1793 = vand.u32 %v1444, 4294901760
    %v1794 = vsub.f32 %v1444, %v1793
    %v1795 = vand.u32 %v1794, 4294901760
    %v1796 = vsub.f32 %v1794, %v1795
    %v1797 = vand.u32 %v1796, 4294901760
    %1798 = vmatpush2.msra.mxu0 %v1797
    %1799 = vmatprep.subr.mxu0 0.0
    %v1800 = vand.u32 %v1443, 4294901760
    %v1801 = vsub.f32 %v1443, %v1800
    %v1802 = vand.u32 %v1801, 4294901760
    %v1803 = vsub.f32 %v1801, %v1802
    %v1804 = vand.u32 %v1803, 4294901760
    %1805 = vmatpush2.msra.mxu0 %v1804
    %v1806 = vand.u32 %v1467, 4294901760
    %1807 = vmatprep.mubr.f32.mxu0 %v1806
    %v1808 = vand.u32 %v1466, 4294901760
    %1809 = vmatmul.mubr.f32.gmra.mxu0 %v1808
    %v1810 = vpop.f32.mrf.mxu0
    %v1811 = vadd.f32 %v1579, %v1810
    %v1812 = vpop.f32.mrf.mxu0
    %1813 = vdwg.mxu0
    %1814 = vmatprep.subr.mxu0 0.0
    %v1815 = vand.u32 %v1442, 4294901760
    %v1816 = vsub.f32 %v1442, %v1815
    %1817 = vmatpush1.msra.mxu0 %v1816
    %1818 = vmatprep.subr.mxu0 0.0
    %v1819 = vand.u32 %v1441, 4294901760
    %v1820 = vsub.f32 %v1441, %v1819
    %1821 = vmatpush1.msra.mxu0 %v1820
    %1822 = vmatprep.subr.mxu0 0.0
    %v1823 = vand.u32 %v1440, 4294901760
    %v1824 = vsub.f32 %v1440, %v1823
    %1825 = vmatpush1.msra.mxu0 %v1824
    %1826 = vmatprep.subr.mxu0 0.0
    %v1827 = vand.u32 %v1439, 4294901760
    %v1828 = vsub.f32 %v1439, %v1827
    %1829 = vmatpush1.msra.mxu0 %v1828
    %1830 = vmatprep.subr.mxu0 0.0
    %v1831 = vand.u32 %v1438, 4294901760
    %v1832 = vsub.f32 %v1438, %v1831
    %1833 = vmatpush1.msra.mxu0 %v1832
    %1834 = vmatprep.subr.mxu0 0.0
    %v1835 = vand.u32 %v1437, 4294901760
    %v1836 = vsub.f32 %v1437, %v1835
    %1837 = vmatpush1.msra.mxu0 %v1836
    %1838 = vmatprep.subr.mxu0 0.0
    %v1839 = vand.u32 %v1436, 4294901760
    %v1840 = vsub.f32 %v1436, %v1839
    %1841 = vmatpush1.msra.mxu0 %v1840
    %1842 = vmatprep.subr.mxu0 0.0
    %v1843 = vand.u32 %v1435, 4294901760
    %v1844 = vsub.f32 %v1435, %v1843
    %1845 = vmatpush1.msra.mxu0 %v1844
    %1846 = vmatprep.subr.mxu0 0.0
    %v1847 = vand.u32 %v1434, 4294901760
    %v1848 = vsub.f32 %v1434, %v1847
    %1849 = vmatpush1.msra.mxu0 %v1848
    %1850 = vmatprep.subr.mxu0 0.0
    %v1851 = vand.u32 %v1433, 4294901760
    %v1852 = vsub.f32 %v1433, %v1851
    %1853 = vmatpush1.msra.mxu0 %v1852
    %1854 = vmatprep.subr.mxu0 0.0
    %v1855 = vand.u32 %v1432, 4294901760
    %v1856 = vsub.f32 %v1432, %v1855
    %1857 = vmatpush1.msra.mxu0 %v1856
    %1858 = vmatprep.subr.mxu0 0.0
    %v1859 = vand.u32 %v1431, 4294901760
    %v1860 = vsub.f32 %v1431, %v1859
    %1861 = vmatpush1.msra.mxu0 %v1860
    %1862 = vmatprep.subr.mxu0 0.0
    %v1863 = vand.u32 %v1430, 4294901760
    %v1864 = vsub.f32 %v1430, %v1863
    %1865 = vmatpush1.msra.mxu0 %v1864
    %1866 = vmatprep.subr.mxu0 0.0
    %v1867 = vand.u32 %v1429, 4294901760
    %v1868 = vsub.f32 %v1429, %v1867
    %1869 = vmatpush1.msra.mxu0 %v1868
    %1870 = vmatprep.subr.mxu0 0.0
    %v1871 = vand.u32 %v1428, 4294901760
    %v1872 = vsub.f32 %v1428, %v1871
    %1873 = vmatpush1.msra.mxu0 %v1872
    %1874 = vmatprep.subr.mxu0 0.0
    %v1875 = vand.u32 %v1427, 4294901760
    %v1876 = vsub.f32 %v1427, %v1875
    %1877 = vmatpush1.msra.mxu0 %v1876
    %1878 = vmatprep.subr.mxu0 0.0
    %v1879 = vand.u32 %v1458, 4294901760
    %v1880 = vsub.f32 %v1458, %v1879
    %1881 = vmatpush2.msra.mxu0 %v1880
    %1882 = vmatprep.subr.mxu0 0.0
    %v1883 = vand.u32 %v1457, 4294901760
    %v1884 = vsub.f32 %v1457, %v1883
    %1885 = vmatpush2.msra.mxu0 %v1884
    %1886 = vmatprep.subr.mxu0 0.0
    %v1887 = vand.u32 %v1456, 4294901760
    %v1888 = vsub.f32 %v1456, %v1887
    %1889 = vmatpush2.msra.mxu0 %v1888
    %1890 = vmatprep.subr.mxu0 0.0
    %v1891 = vand.u32 %v1455, 4294901760
    %v1892 = vsub.f32 %v1455, %v1891
    %1893 = vmatpush2.msra.mxu0 %v1892
    %1894 = vmatprep.subr.mxu0 0.0
    %v1895 = vand.u32 %v1454, 4294901760
    %v1896 = vsub.f32 %v1454, %v1895
    %1897 = vmatpush2.msra.mxu0 %v1896
    %1898 = vmatprep.subr.mxu0 0.0
    %v1899 = vand.u32 %v1453, 4294901760
    %v1900 = vsub.f32 %v1453, %v1899
    %1901 = vmatpush2.msra.mxu0 %v1900
    %1902 = vmatprep.subr.mxu0 0.0
    %v1903 = vand.u32 %v1452, 4294901760
    %v1904 = vsub.f32 %v1452, %v1903
    %1905 = vmatpush2.msra.mxu0 %v1904
    %1906 = vmatprep.subr.mxu0 0.0
    %v1907 = vand.u32 %v1451, 4294901760
    %v1908 = vsub.f32 %v1451, %v1907
    %1909 = vmatpush2.msra.mxu0 %v1908
    %1910 = vmatprep.subr.mxu0 0.0
    %v1911 = vand.u32 %v1450, 4294901760
    %v1912 = vsub.f32 %v1450, %v1911
    %1913 = vmatpush2.msra.mxu0 %v1912
    %1914 = vmatprep.subr.mxu0 0.0
    %v1915 = vand.u32 %v1449, 4294901760
    %v1916 = vsub.f32 %v1449, %v1915
    %1917 = vmatpush2.msra.mxu0 %v1916
    %1918 = vmatprep.subr.mxu0 0.0
    %v1919 = vand.u32 %v1448, 4294901760
    %v1920 = vsub.f32 %v1448, %v1919
    %1921 = vmatpush2.msra.mxu0 %v1920
    %1922 = vmatprep.subr.mxu0 0.0
    %v1923 = vand.u32 %v1447, 4294901760
    %v1924 = vsub.f32 %v1447, %v1923
    %1925 = vmatpush2.msra.mxu0 %v1924
    %1926 = vmatprep.subr.mxu0 0.0
    %v1927 = vand.u32 %v1446, 4294901760
    %v1928 = vsub.f32 %v1446, %v1927
    %1929 = vmatpush2.msra.mxu0 %v1928
    %1930 = vmatprep.subr.mxu0 0.0
    %v1931 = vand.u32 %v1445, 4294901760
    %v1932 = vsub.f32 %v1445, %v1931
    %1933 = vmatpush2.msra.mxu0 %v1932
    %1934 = vmatprep.subr.mxu0 0.0
    %v1935 = vand.u32 %v1444, 4294901760
    %v1936 = vsub.f32 %v1444, %v1935
    %1937 = vmatpush2.msra.mxu0 %v1936
    %1938 = vmatprep.subr.mxu0 0.0
    %v1939 = vand.u32 %v1443, 4294901760
    %v1940 = vsub.f32 %v1443, %v1939
    %1941 = vmatpush2.msra.mxu0 %v1940
    %v1942 = vand.u32 %v1467, 4294901760
    %v1943 = vsub.f32 %v1467, %v1942
    %1944 = vmatprep.mubr.f32.mxu0 %v1943
    %v1945 = vand.u32 %v1466, 4294901760
    %v1946 = vsub.f32 %v1466, %v1945
    %1947 = vmatmul.mubr.f32.gmra.mxu0 %v1946
    %v1948 = vpop.f32.mrf.mxu0
    %v1949 = vadd.f32 %v1811, %v1948
    %v1950 = vpop.f32.mrf.mxu0
    %1951 = vdwg.mxu0
    %1952 = vmatprep.subr.mxu0 0.0
    %v1953 = vand.u32 %v1442, 4294901760
    %1954 = vmatpush1.msra.mxu0 %v1953
    %1955 = vmatprep.subr.mxu0 0.0
    %v1956 = vand.u32 %v1441, 4294901760
    %1957 = vmatpush1.msra.mxu0 %v1956
    %1958 = vmatprep.subr.mxu0 0.0
    %v1959 = vand.u32 %v1440, 4294901760
    %1960 = vmatpush1.msra.mxu0 %v1959
    %1961 = vmatprep.subr.mxu0 0.0
    %v1962 = vand.u32 %v1439, 4294901760
    %1963 = vmatpush1.msra.mxu0 %v1962
    %1964 = vmatprep.subr.mxu0 0.0
    %v1965 = vand.u32 %v1438, 4294901760
    %1966 = vmatpush1.msra.mxu0 %v1965
    %1967 = vmatprep.subr.mxu0 0.0
    %v1968 = vand.u32 %v1437, 4294901760
    %1969 = vmatpush1.msra.mxu0 %v1968
    %1970 = vmatprep.subr.mxu0 0.0
    %v1971 = vand.u32 %v1436, 4294901760
    %1972 = vmatpush1.msra.mxu0 %v1971
    %1973 = vmatprep.subr.mxu0 0.0
    %v1974 = vand.u32 %v1435, 4294901760
    %1975 = vmatpush1.msra.mxu0 %v1974
    %1976 = vmatprep.subr.mxu0 0.0
    %v1977 = vand.u32 %v1434, 4294901760
    %1978 = vmatpush1.msra.mxu0 %v1977
    %1979 = vmatprep.subr.mxu0 0.0
    %v1980 = vand.u32 %v1433, 4294901760
    %1981 = vmatpush1.msra.mxu0 %v1980
    %1982 = vmatprep.subr.mxu0 0.0
    %v1983 = vand.u32 %v1432, 4294901760
    %1984 = vmatpush1.msra.mxu0 %v1983
    %1985 = vmatprep.subr.mxu0 0.0
    %v1986 = vand.u32 %v1431, 4294901760
    %1987 = vmatpush1.msra.mxu0 %v1986
    %1988 = vmatprep.subr.mxu0 0.0
    %v1989 = vand.u32 %v1430, 4294901760
    %1990 = vmatpush1.msra.mxu0 %v1989
    %1991 = vmatprep.subr.mxu0 0.0
    %v1992 = vand.u32 %v1429, 4294901760
    %1993 = vmatpush1.msra.mxu0 %v1992
    %1994 = vmatprep.subr.mxu0 0.0
    %v1995 = vand.u32 %v1428, 4294901760
    %1996 = vmatpush1.msra.mxu0 %v1995
    %1997 = vmatprep.subr.mxu0 0.0
    %v1998 = vand.u32 %v1427, 4294901760
    %1999 = vmatpush1.msra.mxu0 %v1998
    %2000 = vmatprep.subr.mxu0 0.0
    %v2001 = vand.u32 %v1458, 4294901760
    %2002 = vmatpush2.msra.mxu0 %v2001
    %2003 = vmatprep.subr.mxu0 0.0
    %v2004 = vand.u32 %v1457, 4294901760
    %2005 = vmatpush2.msra.mxu0 %v2004
    %2006 = vmatprep.subr.mxu0 0.0
    %v2007 = vand.u32 %v1456, 4294901760
    %2008 = vmatpush2.msra.mxu0 %v2007
    %2009 = vmatprep.subr.mxu0 0.0
    %v2010 = vand.u32 %v1455, 4294901760
    %2011 = vmatpush2.msra.mxu0 %v2010
    %2012 = vmatprep.subr.mxu0 0.0
    %v2013 = vand.u32 %v1454, 4294901760
    %2014 = vmatpush2.msra.mxu0 %v2013
    %2015 = vmatprep.subr.mxu0 0.0
    %v2016 = vand.u32 %v1453, 4294901760
    %2017 = vmatpush2.msra.mxu0 %v2016
    %2018 = vmatprep.subr.mxu0 0.0
    %v2019 = vand.u32 %v1452, 4294901760
    %2020 = vmatpush2.msra.mxu0 %v2019
    %2021 = vmatprep.subr.mxu0 0.0
    %v2022 = vand.u32 %v1451, 4294901760
    %2023 = vmatpush2.msra.mxu0 %v2022
    %2024 = vmatprep.subr.mxu0 0.0
    %v2025 = vand.u32 %v1450, 4294901760
    %2026 = vmatpush2.msra.mxu0 %v2025
    %2027 = vmatprep.subr.mxu0 0.0
    %v2028 = vand.u32 %v1449, 4294901760
    %2029 = vmatpush2.msra.mxu0 %v2028
    %2030 = vmatprep.subr.mxu0 0.0
    %v2031 = vand.u32 %v1448, 4294901760
    %2032 = vmatpush2.msra.mxu0 %v2031
    %2033 = vmatprep.subr.mxu0 0.0
    %v2034 = vand.u32 %v1447, 4294901760
    %2035 = vmatpush2.msra.mxu0 %v2034
    %2036 = vmatprep.subr.mxu0 0.0
    %v2037 = vand.u32 %v1446, 4294901760
    %2038 = vmatpush2.msra.mxu0 %v2037
    %2039 = vmatprep.subr.mxu0 0.0
    %v2040 = vand.u32 %v1445, 4294901760
    %2041 = vmatpush2.msra.mxu0 %v2040
    %2042 = vmatprep.subr.mxu0 0.0
    %v2043 = vand.u32 %v1444, 4294901760
    %2044 = vmatpush2.msra.mxu0 %v2043
    %2045 = vmatprep.subr.mxu0 0.0
    %v2046 = vand.u32 %v1443, 4294901760
    %2047 = vmatpush2.msra.mxu0 %v2046
    %v2048 = vand.u32 %v1467, 4294901760
    %v2049 = vsub.f32 %v1467, %v2048
    %v2050 = vand.u32 %v2049, 4294901760
    %2051 = vmatprep.mubr.f32.mxu0 %v2050
    %v2052 = vand.u32 %v1466, 4294901760
    %v2053 = vsub.f32 %v1466, %v2052
    %v2054 = vand.u32 %v2053, 4294901760
    %2055 = vmatmul.mubr.f32.gmra.mxu0 %v2054
    %v2056 = vpop.f32.mrf.mxu0
    %v2057 = vadd.f32 %v1949, %v2056
    %v2058 = vpop.f32.mrf.mxu0
    %2059 = vdwg.mxu0
    %2060 = vmatprep.subr.mxu0 0.0
    %v2061 = vand.u32 %v1442, 4294901760
    %v2062 = vsub.f32 %v1442, %v2061
    %v2063 = vand.u32 %v2062, 4294901760
    %2064 = vmatpush1.msra.mxu0 %v2063
    %2065 = vmatprep.subr.mxu0 0.0
    %v2066 = vand.u32 %v1441, 4294901760
    %v2067 = vsub.f32 %v1441, %v2066
    %v2068 = vand.u32 %v2067, 4294901760
    %2069 = vmatpush1.msra.mxu0 %v2068
    %2070 = vmatprep.subr.mxu0 0.0
    %v2071 = vand.u32 %v1440, 4294901760
    %v2072 = vsub.f32 %v1440, %v2071
    %v2073 = vand.u32 %v2072, 4294901760
    %2074 = vmatpush1.msra.mxu0 %v2073
    %2075 = vmatprep.subr.mxu0 0.0
    %v2076 = vand.u32 %v1439, 4294901760
    %v2077 = vsub.f32 %v1439, %v2076
    %v2078 = vand.u32 %v2077, 4294901760
    %2079 = vmatpush1.msra.mxu0 %v2078
    %2080 = vmatprep.subr.mxu0 0.0
    %v2081 = vand.u32 %v1438, 4294901760
    %v2082 = vsub.f32 %v1438, %v2081
    %v2083 = vand.u32 %v2082, 4294901760
    %2084 = vmatpush1.msra.mxu0 %v2083
    %2085 = vmatprep.subr.mxu0 0.0
    %v2086 = vand.u32 %v1437, 4294901760
    %v2087 = vsub.f32 %v1437, %v2086
    %v2088 = vand.u32 %v2087, 4294901760
    %2089 = vmatpush1.msra.mxu0 %v2088
    %2090 = vmatprep.subr.mxu0 0.0
    %v2091 = vand.u32 %v1436, 4294901760
    %v2092 = vsub.f32 %v1436, %v2091
    %v2093 = vand.u32 %v2092, 4294901760
    %2094 = vmatpush1.msra.mxu0 %v2093
    %2095 = vmatprep.subr.mxu0 0.0
    %v2096 = vand.u32 %v1435, 4294901760
    %v2097 = vsub.f32 %v1435, %v2096
    %v2098 = vand.u32 %v2097, 4294901760
    %2099 = vmatpush1.msra.mxu0 %v2098
    %2100 = vmatprep.subr.mxu0 0.0
    %v2101 = vand.u32 %v1434, 4294901760
    %v2102 = vsub.f32 %v1434, %v2101
    %v2103 = vand.u32 %v2102, 4294901760
    %2104 = vmatpush1.msra.mxu0 %v2103
    %2105 = vmatprep.subr.mxu0 0.0
    %v2106 = vand.u32 %v1433, 4294901760
    %v2107 = vsub.f32 %v1433, %v2106
    %v2108 = vand.u32 %v2107, 4294901760
    %2109 = vmatpush1.msra.mxu0 %v2108
    %2110 = vmatprep.subr.mxu0 0.0
    %v2111 = vand.u32 %v1432, 4294901760
    %v2112 = vsub.f32 %v1432, %v2111
    %v2113 = vand.u32 %v2112, 4294901760
    %2114 = vmatpush1.msra.mxu0 %v2113
    %2115 = vmatprep.subr.mxu0 0.0
    %v2116 = vand.u32 %v1431, 4294901760
    %v2117 = vsub.f32 %v1431, %v2116
    %v2118 = vand.u32 %v2117, 4294901760
    %2119 = vmatpush1.msra.mxu0 %v2118
    %2120 = vmatprep.subr.mxu0 0.0
    %v2121 = vand.u32 %v1430, 4294901760
    %v2122 = vsub.f32 %v1430, %v2121
    %v2123 = vand.u32 %v2122, 4294901760
    %2124 = vmatpush1.msra.mxu0 %v2123
    %2125 = vmatprep.subr.mxu0 0.0
    %v2126 = vand.u32 %v1429, 4294901760
    %v2127 = vsub.f32 %v1429, %v2126
    %v2128 = vand.u32 %v2127, 4294901760
    %2129 = vmatpush1.msra.mxu0 %v2128
    %2130 = vmatprep.subr.mxu0 0.0
    %v2131 = vand.u32 %v1428, 4294901760
    %v2132 = vsub.f32 %v1428, %v2131
    %v2133 = vand.u32 %v2132, 4294901760
    %2134 = vmatpush1.msra.mxu0 %v2133
    %2135 = vmatprep.subr.mxu0 0.0
    %v2136 = vand.u32 %v1427, 4294901760
    %v2137 = vsub.f32 %v1427, %v2136
    %v2138 = vand.u32 %v2137, 4294901760
    %2139 = vmatpush1.msra.mxu0 %v2138
    %2140 = vmatprep.subr.mxu0 0.0
    %v2141 = vand.u32 %v1458, 4294901760
    %v2142 = vsub.f32 %v1458, %v2141
    %v2143 = vand.u32 %v2142, 4294901760
    %2144 = vmatpush2.msra.mxu0 %v2143
    %2145 = vmatprep.subr.mxu0 0.0
    %v2146 = vand.u32 %v1457, 4294901760
    %v2147 = vsub.f32 %v1457, %v2146
    %v2148 = vand.u32 %v2147, 4294901760
    %2149 = vmatpush2.msra.mxu0 %v2148
    %2150 = vmatprep.subr.mxu0 0.0
    %v2151 = vand.u32 %v1456, 4294901760
    %v2152 = vsub.f32 %v1456, %v2151
    %v2153 = vand.u32 %v2152, 4294901760
    %2154 = vmatpush2.msra.mxu0 %v2153
    %2155 = vmatprep.subr.mxu0 0.0
    %v2156 = vand.u32 %v1455, 4294901760
    %v2157 = vsub.f32 %v1455, %v2156
    %v2158 = vand.u32 %v2157, 4294901760
    %2159 = vmatpush2.msra.mxu0 %v2158
    %2160 = vmatprep.subr.mxu0 0.0
    %v2161 = vand.u32 %v1454, 4294901760
    %v2162 = vsub.f32 %v1454, %v2161
    %v2163 = vand.u32 %v2162, 4294901760
    %2164 = vmatpush2.msra.mxu0 %v2163
    %2165 = vmatprep.subr.mxu0 0.0
    %v2166 = vand.u32 %v1453, 4294901760
    %v2167 = vsub.f32 %v1453, %v2166
    %v2168 = vand.u32 %v2167, 4294901760
    %2169 = vmatpush2.msra.mxu0 %v2168
    %2170 = vmatprep.subr.mxu0 0.0
    %v2171 = vand.u32 %v1452, 4294901760
    %v2172 = vsub.f32 %v1452, %v2171
    %v2173 = vand.u32 %v2172, 4294901760
    %2174 = vmatpush2.msra.mxu0 %v2173
    %2175 = vmatprep.subr.mxu0 0.0
    %v2176 = vand.u32 %v1451, 4294901760
    %v2177 = vsub.f32 %v1451, %v2176
    %v2178 = vand.u32 %v2177, 4294901760
    %2179 = vmatpush2.msra.mxu0 %v2178
    %2180 = vmatprep.subr.mxu0 0.0
    %v2181 = vand.u32 %v1450, 4294901760
    %v2182 = vsub.f32 %v1450, %v2181
    %v2183 = vand.u32 %v2182, 4294901760
    %2184 = vmatpush2.msra.mxu0 %v2183
    %2185 = vmatprep.subr.mxu0 0.0
    %v2186 = vand.u32 %v1449, 4294901760
    %v2187 = vsub.f32 %v1449, %v2186
    %v2188 = vand.u32 %v2187, 4294901760
    %2189 = vmatpush2.msra.mxu0 %v2188
    %2190 = vmatprep.subr.mxu0 0.0
    %v2191 = vand.u32 %v1448, 4294901760
    %v2192 = vsub.f32 %v1448, %v2191
    %v2193 = vand.u32 %v2192, 4294901760
    %2194 = vmatpush2.msra.mxu0 %v2193
    %2195 = vmatprep.subr.mxu0 0.0
    %v2196 = vand.u32 %v1447, 4294901760
    %v2197 = vsub.f32 %v1447, %v2196
    %v2198 = vand.u32 %v2197, 4294901760
    %2199 = vmatpush2.msra.mxu0 %v2198
    %2200 = vmatprep.subr.mxu0 0.0
    %v2201 = vand.u32 %v1446, 4294901760
    %v2202 = vsub.f32 %v1446, %v2201
    %v2203 = vand.u32 %v2202, 4294901760
    %2204 = vmatpush2.msra.mxu0 %v2203
    %2205 = vmatprep.subr.mxu0 0.0
    %v2206 = vand.u32 %v1445, 4294901760
    %v2207 = vsub.f32 %v1445, %v2206
    %v2208 = vand.u32 %v2207, 4294901760
    %2209 = vmatpush2.msra.mxu0 %v2208
    %2210 = vmatprep.subr.mxu0 0.0
    %v2211 = vand.u32 %v1444, 4294901760
    %v2212 = vsub.f32 %v1444, %v2211
    %v2213 = vand.u32 %v2212, 4294901760
    %2214 = vmatpush2.msra.mxu0 %v2213
    %2215 = vmatprep.subr.mxu0 0.0
    %v2216 = vand.u32 %v1443, 4294901760
    %v2217 = vsub.f32 %v1443, %v2216
    %v2218 = vand.u32 %v2217, 4294901760
    %2219 = vmatpush2.msra.mxu0 %v2218
    %v2220 = vand.u32 %v1467, 4294901760
    %2221 = vmatprep.mubr.f32.mxu0 %v2220
    %v2222 = vand.u32 %v1466, 4294901760
    %2223 = vmatmul.mubr.f32.gmra.mxu0 %v2222
    %v2224 = vpop.f32.mrf.mxu0
    %v2225 = vadd.f32 %v2057, %v2224
    %v2226 = vpop.f32.mrf.mxu0
    %2227 = vdwg.mxu0
    %2228 = vmatprep.subr.mxu0 0.0
    %v2229 = vand.u32 %v1442, 4294901760
    %2230 = vmatpush1.msra.mxu0 %v2229
    %2231 = vmatprep.subr.mxu0 0.0
    %v2232 = vand.u32 %v1441, 4294901760
    %2233 = vmatpush1.msra.mxu0 %v2232
    %2234 = vmatprep.subr.mxu0 0.0
    %v2235 = vand.u32 %v1440, 4294901760
    %2236 = vmatpush1.msra.mxu0 %v2235
    %2237 = vmatprep.subr.mxu0 0.0
    %v2238 = vand.u32 %v1439, 4294901760
    %2239 = vmatpush1.msra.mxu0 %v2238
    %2240 = vmatprep.subr.mxu0 0.0
    %v2241 = vand.u32 %v1438, 4294901760
    %2242 = vmatpush1.msra.mxu0 %v2241
    %2243 = vmatprep.subr.mxu0 0.0
    %v2244 = vand.u32 %v1437, 4294901760
    %2245 = vmatpush1.msra.mxu0 %v2244
    %2246 = vmatprep.subr.mxu0 0.0
    %v2247 = vand.u32 %v1436, 4294901760
    %2248 = vmatpush1.msra.mxu0 %v2247
    %2249 = vmatprep.subr.mxu0 0.0
    %v2250 = vand.u32 %v1435, 4294901760
    %2251 = vmatpush1.msra.mxu0 %v2250
    %2252 = vmatprep.subr.mxu0 0.0
    %v2253 = vand.u32 %v1434, 4294901760
    %2254 = vmatpush1.msra.mxu0 %v2253
    %2255 = vmatprep.subr.mxu0 0.0
    %v2256 = vand.u32 %v1433, 4294901760
    %2257 = vmatpush1.msra.mxu0 %v2256
    %2258 = vmatprep.subr.mxu0 0.0
    %v2259 = vand.u32 %v1432, 4294901760
    %2260 = vmatpush1.msra.mxu0 %v2259
    %2261 = vmatprep.subr.mxu0 0.0
    %v2262 = vand.u32 %v1431, 4294901760
    %2263 = vmatpush1.msra.mxu0 %v2262
    %2264 = vmatprep.subr.mxu0 0.0
    %v2265 = vand.u32 %v1430, 4294901760
    %2266 = vmatpush1.msra.mxu0 %v2265
    %2267 = vmatprep.subr.mxu0 0.0
    %v2268 = vand.u32 %v1429, 4294901760
    %2269 = vmatpush1.msra.mxu0 %v2268
    %2270 = vmatprep.subr.mxu0 0.0
    %v2271 = vand.u32 %v1428, 4294901760
    %2272 = vmatpush1.msra.mxu0 %v2271
    %2273 = vmatprep.subr.mxu0 0.0
    %v2274 = vand.u32 %v1427, 4294901760
    %2275 = vmatpush1.msra.mxu0 %v2274
    %2276 = vmatprep.subr.mxu0 0.0
    %v2277 = vand.u32 %v1458, 4294901760
    %2278 = vmatpush2.msra.mxu0 %v2277
    %2279 = vmatprep.subr.mxu0 0.0
    %v2280 = vand.u32 %v1457, 4294901760
    %2281 = vmatpush2.msra.mxu0 %v2280
    %2282 = vmatprep.subr.mxu0 0.0
    %v2283 = vand.u32 %v1456, 4294901760
    %2284 = vmatpush2.msra.mxu0 %v2283
    %2285 = vmatprep.subr.mxu0 0.0
    %v2286 = vand.u32 %v1455, 4294901760
    %2287 = vmatpush2.msra.mxu0 %v2286
    %2288 = vmatprep.subr.mxu0 0.0
    %v2289 = vand.u32 %v1454, 4294901760
    %2290 = vmatpush2.msra.mxu0 %v2289
    %2291 = vmatprep.subr.mxu0 0.0
    %v2292 = vand.u32 %v1453, 4294901760
    %2293 = vmatpush2.msra.mxu0 %v2292
    %2294 = vmatprep.subr.mxu0 0.0
    %v2295 = vand.u32 %v1452, 4294901760
    %2296 = vmatpush2.msra.mxu0 %v2295
    %2297 = vmatprep.subr.mxu0 0.0
    %v2298 = vand.u32 %v1451, 4294901760
    %2299 = vmatpush2.msra.mxu0 %v2298
    %2300 = vmatprep.subr.mxu0 0.0
    %v2301 = vand.u32 %v1450, 4294901760
    %2302 = vmatpush2.msra.mxu0 %v2301
    %2303 = vmatprep.subr.mxu0 0.0
    %v2304 = vand.u32 %v1449, 4294901760
    %2305 = vmatpush2.msra.mxu0 %v2304
    %2306 = vmatprep.subr.mxu0 0.0
    %v2307 = vand.u32 %v1448, 4294901760
    %2308 = vmatpush2.msra.mxu0 %v2307
    %2309 = vmatprep.subr.mxu0 0.0
    %v2310 = vand.u32 %v1447, 4294901760
    %2311 = vmatpush2.msra.mxu0 %v2310
    %2312 = vmatprep.subr.mxu0 0.0
    %v2313 = vand.u32 %v1446, 4294901760
    %2314 = vmatpush2.msra.mxu0 %v2313
    %2315 = vmatprep.subr.mxu0 0.0
    %v2316 = vand.u32 %v1445, 4294901760
    %2317 = vmatpush2.msra.mxu0 %v2316
    %2318 = vmatprep.subr.mxu0 0.0
    %v2319 = vand.u32 %v1444, 4294901760
    %2320 = vmatpush2.msra.mxu0 %v2319
    %2321 = vmatprep.subr.mxu0 0.0
    %v2322 = vand.u32 %v1443, 4294901760
    %2323 = vmatpush2.msra.mxu0 %v2322
    %v2324 = vand.u32 %v1467, 4294901760
    %2325 = vmatprep.mubr.f32.mxu0 %v2324
    %v2326 = vand.u32 %v1466, 4294901760
    %2327 = vmatmul.mubr.f32.gmra.mxu0 %v2326
    %v2328 = vpop.f32.mrf.mxu0
    %v2329 = vadd.f32 %v2225, %v2328
    %v2330 = vpop.f32.mrf.mxu0
    %2331 = vdwg.mxu0
    %vm2332 = vcmask 254976
    %2333 = vst.msk [vmem:[#allocation2] sm:$0x3] %vm2332, %v2329
    // Predicated region
    $region22: #{tpu_custom_call.1} parent=1 // pred_check
      _
    $region23: #{tpu_custom_call.1} parent=1 // pred_check_branch
      %2335 = sbr.rel (0) target = $region25
    $region24: #{tpu_custom_call.1} parent=1 // pred_region
      %s2337 = ssub.s32 32, 32
      %2338 = vsyncadd [#allocation3], %s2337
      %s2340 = sshll.u32 [#allocation2], 4
      %s2341 = int_to_ptr.vmem [resolvable:$true] %s2340
      %2343 = dma.vmem_to_hbm [thread:$0]  %s2341, 32, %s5, [#allocation3]
    $region25: #{tpu_custom_call.1} parent=1 // pred_fallthru
      _
    // Predicated region
    $region26: #{tpu_custom_call.1} parent=1 // pred_check
      _
    $region27: #{tpu_custom_call.1} parent=1 // pred_check_branch
      %2345 = sbr.rel (0) target = $region29
    $region28: #{tpu_custom_call.1} parent=1 // pred_region
      %2346 = dma.done [#allocation3], 32
    $region29: #{tpu_custom_call.1} parent=1 // pred_fallthru
      _
    %2347 = vsyncpa [#allocation3], 1

</llo_original>
